<compile_context>
chip_gen: v7x
topology: tpu7x:2x2x1
jax: 0.10.0
libtpu: 0.0.40
codegen_flags: <defaults>
</compile_context>

<pallas_src>
import functools

import jax
import jax.numpy as jnp
from jax.experimental import pallas as pl
from jax.experimental.pallas import tpu as pltpu


def _round_up(n, m):
    return ((n + m - 1) // m) * m


def _device_vmem_bytes():
    """Physical VMEM of the current TPU; conservative 64 MiB if unqueryable."""
    try:
        info = pltpu.get_tpu_info()
        return int(getattr(info, "vmem_capacity_bytes", 64 * 1024 * 1024))
    except Exception:
        return 64 * 1024 * 1024


def _make_mlp_kernel(n_hidden, use_masks):
    """Fused MLP: x -> [Linear -> ReLU -> (mask)] * n_hidden -> Linear -> softmax."""

    def kernel(*refs):
        pos = 0
        x_ref = refs[pos]; pos += 1
        mask_refs = ()
        if use_masks:
            mask_refs = refs[pos:pos + n_hidden]; pos += n_hidden
        w_refs = refs[pos:pos + n_hidden]; pos += n_hidden
        wl_ref = refs[pos]; pos += 1
        bias_ref = refs[pos]; pos += 1
        out_ref = refs[pos]

        compute_dtype = w_refs[0].dtype

        h = x_ref[...]                                             # (TB, D0)
        for l in range(n_hidden):
            # MXU matmul, f32 accumulation; weight already (in, out) -> no transpose.
            h = jnp.dot(h, w_refs[l][...], preferred_element_type=jnp.float32)
            h = jnp.maximum(h, 0.0)                                # ReLU (VPU)
            if use_masks:
                h = h * mask_refs[l][...]                          # dropout mask (promotes to f32)
            h = h.astype(compute_dtype)                            # feed next MXU matmul

        logits = jnp.dot(h, wl_ref[...], preferred_element_type=jnp.float32)
        # Kill the zero-padded class columns: bias row is 0 for real classes,
        # -1e30 for pad columns (precomputed once in the wrapper).
        logits = logits + bias_ref[...]

        # Numerically stable softmax over dim=1 (class axis fully inside the block).
        m = jnp.max(logits, axis=1, keepdims=True)
        e = jnp.exp(logits - m)
        denom = jnp.sum(e, axis=1, keepdims=True)
        out_ref[...] = (e * pl.reciprocal(denom, approx=True)).astype(out_ref.dtype)

    return kernel


def prepare_params(hidden_weights, w_last, *, compute_dtype=jnp.bfloat16):
    """One-time layout prep (hoisted out of the forward): transpose weights to
    (in, out), cast to the MXU operand dtype, pad the class dim to 128 lanes,
    and build the pad-column additive bias row."""
    n_hidden = len(hidden_weights)
    dims = [hidden_weights[0].shape[1]] + [w.shape[0] for w in hidden_weights]
    C, Dl = w_last.shape
    assert Dl == dims[-1]
    C_pad = _round_up(C, 128)

    w_ts = tuple(jnp.asarray(w, compute_dtype).T for w in hidden_weights)   # (in, out)
    wl_t = jnp.asarray(w_last, compute_dtype).T                             # (D_last, C)
    if C_pad != C:
        wl_t = jnp.pad(wl_t, ((0, 0), (0, C_pad - C)))                      # zero pad cols

    col = jnp.arange(C_pad)[None, :]
    class_bias = jnp.where(col < C, 0.0, -1e30).astype(jnp.float32)         # (1, C_pad)

    return {"w_ts": w_ts, "wl_t": wl_t, "class_bias": class_bias,
            "num_classes": C}


@functools.partial(
    jax.jit,
    static_argnames=("batch_tile", "num_classes", "single_buffer_weights"))
def _forward_jit(x, w_ts, wl_t, class_bias, do_masks, *, batch_tile,
                 num_classes, single_buffer_weights):
    n_hidden = len(w_ts)
    compute_dtype = w_ts[0].dtype
    B, D0 = x.shape
    assert w_ts[0].shape[0] == D0
    dims = [D0] + [w.shape[1] for w in w_ts]
    Dl, C_pad = wl_t.shape
    assert Dl == dims[-1]
    use_masks = do_masks is not None

    # ---- batch tiling ----
    B8 = _round_up(B, 8)
    TB = max(8, (min(batch_tile, B8) // 8) * 8)
    # v7x has 2 TensorCores; keep >= 2 grid steps so the "parallel" batch axis
    # actually shards across both cores (harmless on 1-TC v5e/v6e).
    if B8 // TB < 2 and B8 >= 16:
        TB = max(8, ((B8 // 2) // 8) * 8)
    B_pad = _round_up(B, TB)
    grid = (B_pad // TB,)

    # ---- operand prep (fused around the pallas_call by jit) ----
    x_p = x.astype(compute_dtype)
    if B_pad != B:
        x_p = jnp.pad(x_p, ((0, B_pad - B), (0, 0)))

    mask_args = []
    if use_masks:
        assert len(do_masks) == n_hidden
        for l in range(n_hidden):
            mp = do_masks[l].astype(compute_dtype)   # bf16 by default -> halved mask DMA
            if B_pad != B:
                mp = jnp.pad(mp, ((0, B_pad - B), (0, 0)))
            mask_args.append(mp)

    # ---- BlockSpecs ----
    def tiled(cols):
        return pl.BlockSpec((TB, cols), lambda i: (i, 0))

    def resident(shape):
        # Constant index_map -> stays in VMEM across all grid steps; request a
        # single buffer (default pipelining would allocate 2x).
        if single_buffer_weights:
            return pl.BlockSpec(shape, lambda i: (0, 0),
                                pipeline_mode=pl.Buffered(1))
        return pl.BlockSpec(shape, lambda i: (0, 0))

    in_specs = [tiled(D0)]
    if use_masks:
        in_specs += [tiled(dims[l + 1]) for l in range(n_hidden)]
    in_specs += [resident((dims[l], dims[l + 1])) for l in range(n_hidden)]
    in_specs += [resident((dims[-1], C_pad)), resident((1, C_pad))]
    out_specs = pl.BlockSpec((TB, C_pad), lambda i: (i, 0))

    # ---- VMEM budget, clamped to the device's physical VMEM ----
    itemsize = jnp.dtype(compute_dtype).itemsize
    wbuf = 1 if single_buffer_weights else 2
    vmem = 2 * TB * D0 * itemsize                                   # x tile (double buffered)
    if use_masks:
        vmem += sum(2 * TB * dims[l + 1] * itemsize for l in range(n_hidden))
    vmem += wbuf * sum(dims[l] * dims[l + 1] * itemsize for l in range(n_hidden))
    vmem += wbuf * dims[-1] * C_pad * itemsize
    vmem += wbuf * C_pad * 4                                        # class_bias (f32)
    vmem += 2 * TB * C_pad * 4                                      # f32 output tile
    vmem_cap = _device_vmem_bytes() - (8 << 20)                     # 56 MiB on v7x, 120 MiB on v5e/v6e
    vmem_limit = int(min(max(int(vmem * 1.25) + (4 << 20), 32 << 20), vmem_cap))

    kernel = _make_mlp_kernel(n_hidden, use_masks)

    probs_padded = pl.pallas_call(
        kernel,
        out_shape=jax.ShapeDtypeStruct((B_pad, C_pad), jnp.float32),
        grid_spec=pltpu.PrefetchScalarGridSpec(
            num_scalar_prefetch=0,
            grid=grid,
            in_specs=in_specs,
            out_specs=out_specs,
        ),
        compiler_params=pltpu.CompilerParams(
            dimension_semantics=("parallel",),
            vmem_limit_bytes=vmem_limit,
        ),
    )(x_p, *mask_args, *w_ts, wl_t, class_bias)

    return probs_padded[:B, :num_classes]


# Resolved lazily on first forward: does this JAX build accept
# pipeline_mode=pl.Buffered(1) on the resident weight BlockSpecs?
_WEIGHT_SINGLE_BUFFER_OK = None


def netfc_forward_prepared(x, params, do_masks=None, *, batch_tile=256):
    """Forward pass using weights prepared once by prepare_params()."""
    global _WEIGHT_SINGLE_BUFFER_OK
    w_ts = params["w_ts"]
    wl_t = params["wl_t"]
    class_bias = params["class_bias"]
    num_classes = params["num_classes"]
    masks = None if do_masks is None else tuple(do_masks)

    if _WEIGHT_SINGLE_BUFFER_OK is None:
        try:
            out = _forward_jit(x, w_ts, wl_t, class_bias, masks,
                               batch_tile=batch_tile, num_classes=num_classes,
                               single_buffer_weights=True)
            jax.block_until_ready(out)
            _WEIGHT_SINGLE_BUFFER_OK = True
            return out
        except Exception:
            # This Pallas build rejects Buffered(1); fall back to default
            # double-buffered weights (correctness identical, more VMEM).
            _WEIGHT_SINGLE_BUFFER_OK = False

    return _forward_jit(x, w_ts, wl_t, class_bias, masks,
                        batch_tile=batch_tile, num_classes=num_classes,
                        single_buffer_weights=_WEIGHT_SINGLE_BUFFER_OK)


def netfc_forward(x, hidden_weights, w_last, do_masks=None, *,
                  batch_tile=256, compute_dtype=jnp.bfloat16):
    """Convenience wrapper: prepares the weights and runs the forward.

    For repeated calls, call prepare_params() once and use
    netfc_forward_prepared() to avoid re-transposing the weights every step.
    """
    params = prepare_params(hidden_weights, w_last, compute_dtype=compute_dtype)
    return netfc_forward_prepared(x, params, do_masks, batch_tile=batch_tile)


def reference_forward(x, hidden_weights, w_last, do_masks=None,
                      compute_dtype=jnp.float32):
    """Pure-JAX reference matching the PyTorch module's forward (optionally with
    the same operand-dtype casting the kernel applies)."""
    h = jnp.asarray(x, compute_dtype)
    for l, w in enumerate(hidden_weights):
        h = jnp.dot(h, jnp.asarray(w, compute_dtype).T,
                    preferred_element_type=jnp.float32)
        h = jax.nn.relu(h)
        if do_masks is not None:
            h = h * jnp.asarray(do_masks[l], compute_dtype)
        h = h.astype(compute_dtype)
    logits = jnp.dot(h, jnp.asarray(w_last, compute_dtype).T,
                     preferred_element_type=jnp.float32)
    return jax.nn.softmax(logits, axis=1)


if __name__ == "__main__":
    key = jax.random.PRNGKey(0)

    # Small-shape stand-in for the real config ([3072, 1024, 1024, 1024], 10 classes).
    dims = [64, 32, 32, 32]
    num_classes = 10
    B = 16
    n_hidden = len(dims) - 1

    kx, kl, *rest = jax.random.split(key, 2 + 2 * n_hidden)
    kws, kms = rest[:n_hidden], rest[n_hidden:]

    x = jax.random.normal(kx, (B, dims[0]), jnp.float32)

    # Module init: uniform(-sqrt(6/nin), sqrt(6/nin)), bias=False.
    hidden_weights = []
    for d in range(n_hidden):
        limit = (6.0 / dims[d]) ** 0.5
        hidden_weights.append(
            jax.random.uniform(kws[d], (dims[d + 1], dims[d]), jnp.float32,
                               minval=-limit, maxval=limit))
    fl_limit = (6.0 / dims[-1]) ** 0.5
    w_last = jax.random.uniform(kl, (num_classes, dims[-1]), jnp.float32,
                                minval=-fl_limit, maxval=fl_limit)

    # Dropout-style masks (keep prob 0.9, inverted-dropout scaling), one per hidden layer.
    do_masks = []
    for d in range(n_hidden):
        keep = jax.random.bernoulli(kms[d], 0.9, (B, dims[d + 1]))
        do_masks.append(keep.astype(jnp.float32) / 0.9)

    # 1) Default config: bf16 MXU operands, weights prepared once, masks in bf16.
    params_bf16 = prepare_params(hidden_weights, w_last, compute_dtype=jnp.bfloat16)
    probs_bf16 = netfc_forward_prepared(x, params_bf16, do_masks)
    jax.block_until_ready(probs_bf16)
    assert probs_bf16.shape == (B, num_classes)
    ref_bf16 = reference_forward(x, hidden_weights, w_last, do_masks,
                                 compute_dtype=jnp.bfloat16)
    assert jnp.allclose(probs_bf16, ref_bf16, atol=2e-2, rtol=2e-2)
    assert jnp.allclose(jnp.sum(probs_bf16, axis=1), 1.0, atol=1e-2)

    # 2) f32 operands, masked branch (batch_tile=8 -> 2 pipelined grid steps).
    params_f32 = prepare_params(hidden_weights, w_last, compute_dtype=jnp.float32)
    probs_f32 = netfc_forward_prepared(x, params_f32, do_masks, batch_tile=8)
    jax.block_until_ready(probs_f32)
    ref_f32 = reference_forward(x, hidden_weights, w_last, do_masks)
    assert jnp.allclose(probs_f32, ref_f32, atol=2e-2, rtol=2e-2)

    # 3) do_masks=None branch via the convenience wrapper.
    probs_nm = netfc_forward(x, hidden_weights, w_last, None,
                             batch_tile=8, compute_dtype=jnp.float32)
    jax.block_until_ready(probs_nm)
    ref_nm = reference_forward(x, hidden_weights, w_last, None)
    assert probs_nm.shape == (B, num_classes)
    assert jnp.allclose(probs_nm, ref_nm, atol=2e-2, rtol=2e-2)

    print("KERNEL_OK")
</pallas_src>

<mosaic_0001>
module attributes {stable_mosaic.version = 11 : i64} {
  func.func @kernel(%arg0: i32, %arg1: memref<8x64xbf16, #tpu.memory_space<vmem>>, %arg2: memref<8x32xbf16, #tpu.memory_space<vmem>>, %arg3: memref<8x32xbf16, #tpu.memory_space<vmem>>, %arg4: memref<8x32xbf16, #tpu.memory_space<vmem>>, %arg5: memref<64x32xbf16, #tpu.memory_space<vmem>>, %arg6: memref<32x32xbf16, #tpu.memory_space<vmem>>, %arg7: memref<32x32xbf16, #tpu.memory_space<vmem>>, %arg8: memref<32x128xbf16, #tpu.memory_space<vmem>>, %arg9: memref<1x128xf32, #tpu.memory_space<vmem>>, %arg10: memref<8x128xf32, #tpu.memory_space<vmem>>) attributes {dimension_semantics = [#tpu.dimension_semantics<parallel>], iteration_bounds = array<i64: 2>, scalar_prefetch = 0 : i64, scratch_operands = 0 : i64, tpu.core_type = #tpu.core_type<tc>, window_params = [{transform_indices = @transform_0, window_bounds = array<i64: 8, 64>}, {transform_indices = @transform_1, window_bounds = array<i64: 8, 32>}, {transform_indices = @transform_2, window_bounds = array<i64: 8, 32>}, {transform_indices = @transform_3, window_bounds = array<i64: 8, 32>}, {pipeline_mode = #tpu.pipeline_mode<synchronous>, transform_indices = @transform_4, window_bounds = array<i64: 64, 32>}, {pipeline_mode = #tpu.pipeline_mode<synchronous>, transform_indices = @transform_5, window_bounds = array<i64: 32, 32>}, {pipeline_mode = #tpu.pipeline_mode<synchronous>, transform_indices = @transform_6, window_bounds = array<i64: 32, 32>}, {pipeline_mode = #tpu.pipeline_mode<synchronous>, transform_indices = @transform_7, window_bounds = array<i64: 32, 128>}, {pipeline_mode = #tpu.pipeline_mode<synchronous>, transform_indices = @transform_8, window_bounds = array<i64: 1, 128>}, {transform_indices = @transform_9, window_bounds = array<i64: 8, 128>}]} {
    %c0 = arith.constant 0 : index
    %c0_0 = arith.constant 0 : index
    %0 = vector.load %arg1[%c0, %c0_0] : memref<8x64xbf16, #tpu.memory_space<vmem>>, vector<8x64xbf16>
    %c0_1 = arith.constant 0 : index
    %c0_2 = arith.constant 0 : index
    %1 = vector.load %arg5[%c0_1, %c0_2] : memref<64x32xbf16, #tpu.memory_space<vmem>>, vector<64x32xbf16>
    %cst = arith.constant dense<0.000000e+00> : vector<8x32xf32>
    %2 = tpu.matmul %0, %1, %cst {dimension_numbers = #tpu.dot_dimension_numbers<[1], [0], [0], [1], [0, 0, 1, 1], [], []>} : vector<8x64xbf16>, vector<64x32xbf16>, vector<8x32xf32> -> vector<8x32xf32>
    %cst_3 = arith.constant 0.000000e+00 : f32
    %3 = vector.broadcast %cst_3 : f32 to vector<8x32xf32>
    %4 = arith.maximumf %2, %3 : vector<8x32xf32>
    %c0_4 = arith.constant 0 : index
    %c0_5 = arith.constant 0 : index
    %5 = vector.load %arg2[%c0_4, %c0_5] : memref<8x32xbf16, #tpu.memory_space<vmem>>, vector<8x32xbf16>
    %6 = arith.extf %5 : vector<8x32xbf16> to vector<8x32xf32>
    %7 = arith.mulf %4, %6 : vector<8x32xf32>
    %8 = arith.truncf %7 : vector<8x32xf32> to vector<8x32xbf16>
    %c0_6 = arith.constant 0 : index
    %c0_7 = arith.constant 0 : index
    %9 = vector.load %arg6[%c0_6, %c0_7] : memref<32x32xbf16, #tpu.memory_space<vmem>>, vector<32x32xbf16>
    %cst_8 = arith.constant dense<0.000000e+00> : vector<8x32xf32>
    %10 = tpu.matmul %8, %9, %cst_8 {dimension_numbers = #tpu.dot_dimension_numbers<[1], [0], [0], [1], [0, 0, 1, 1], [], []>} : vector<8x32xbf16>, vector<32x32xbf16>, vector<8x32xf32> -> vector<8x32xf32>
    %cst_9 = arith.constant 0.000000e+00 : f32
    %11 = vector.broadcast %cst_9 : f32 to vector<8x32xf32>
    %12 = arith.maximumf %10, %11 : vector<8x32xf32>
    %c0_10 = arith.constant 0 : index
    %c0_11 = arith.constant 0 : index
    %13 = vector.load %arg3[%c0_10, %c0_11] : memref<8x32xbf16, #tpu.memory_space<vmem>>, vector<8x32xbf16>
    %14 = arith.extf %13 : vector<8x32xbf16> to vector<8x32xf32>
    %15 = arith.mulf %12, %14 : vector<8x32xf32>
    %16 = arith.truncf %15 : vector<8x32xf32> to vector<8x32xbf16>
    %c0_12 = arith.constant 0 : index
    %c0_13 = arith.constant 0 : index
    %17 = vector.load %arg7[%c0_12, %c0_13] : memref<32x32xbf16, #tpu.memory_space<vmem>>, vector<32x32xbf16>
    %cst_14 = arith.constant dense<0.000000e+00> : vector<8x32xf32>
    %18 = tpu.matmul %16, %17, %cst_14 {dimension_numbers = #tpu.dot_dimension_numbers<[1], [0], [0], [1], [0, 0, 1, 1], [], []>} : vector<8x32xbf16>, vector<32x32xbf16>, vector<8x32xf32> -> vector<8x32xf32>
    %cst_15 = arith.constant 0.000000e+00 : f32
    %19 = vector.broadcast %cst_15 : f32 to vector<8x32xf32>
    %20 = arith.maximumf %18, %19 : vector<8x32xf32>
    %c0_16 = arith.constant 0 : index
    %c0_17 = arith.constant 0 : index
    %21 = vector.load %arg4[%c0_16, %c0_17] : memref<8x32xbf16, #tpu.memory_space<vmem>>, vector<8x32xbf16>
    %22 = arith.extf %21 : vector<8x32xbf16> to vector<8x32xf32>
    %23 = arith.mulf %20, %22 : vector<8x32xf32>
    %24 = arith.truncf %23 : vector<8x32xf32> to vector<8x32xbf16>
    %c0_18 = arith.constant 0 : index
    %c0_19 = arith.constant 0 : index
    %25 = vector.load %arg8[%c0_18, %c0_19] : memref<32x128xbf16, #tpu.memory_space<vmem>>, vector<32x128xbf16>
    %cst_20 = arith.constant dense<0.000000e+00> : vector<8x128xf32>
    %26 = tpu.matmul %24, %25, %cst_20 {dimension_numbers = #tpu.dot_dimension_numbers<[1], [0], [0], [1], [0, 0, 1, 1], [], []>} : vector<8x32xbf16>, vector<32x128xbf16>, vector<8x128xf32> -> vector<8x128xf32>
    %c0_21 = arith.constant 0 : index
    %c0_22 = arith.constant 0 : index
    %27 = vector.load %arg9[%c0_21, %c0_22] : memref<1x128xf32, #tpu.memory_space<vmem>>, vector<1x128xf32>
    %28 = vector.broadcast %27 : vector<1x128xf32> to vector<8x128xf32>
    %29 = arith.addf %26, %28 : vector<8x128xf32>
    %cst_23 = arith.constant dense<0xFF800000> : vector<8xf32>
    %30 = vector.multi_reduction <maximumf>, %29, %cst_23 [1] : vector<8x128xf32> to vector<8xf32>
    %31 = vector.shape_cast %30 : vector<8xf32> to vector<8x1xf32>
    %32 = vector.broadcast %31 : vector<8x1xf32> to vector<8x128xf32>
    %33 = arith.subf %29, %32 : vector<8x128xf32>
    %34 = math.exp %33 : vector<8x128xf32>
    %cst_24 = arith.constant dense<0.000000e+00> : vector<8xf32>
    %35 = vector.multi_reduction <add>, %34, %cst_24 [1] : vector<8x128xf32> to vector<8xf32>
    %36 = vector.shape_cast %35 : vector<8xf32> to vector<8x1xf32>
    %37 = tpu.reciprocal %36 {approx = true} : vector<8x1xf32> -> vector<8x1xf32>
    %38 = vector.broadcast %37 : vector<8x1xf32> to vector<8x128xf32>
    %39 = arith.mulf %34, %38 : vector<8x128xf32>
    %c0_25 = arith.constant 0 : index
    %c0_26 = arith.constant 0 : index
    %40 = vector.load %arg10[%c0_25, %c0_26] : memref<8x128xf32, #tpu.memory_space<vmem>>, vector<8x128xf32>
    tpu.vector_store %arg10[%c0_25, %c0_26], %39 {strides = array<i32>} : memref<8x128xf32, #tpu.memory_space<vmem>>, vector<8x128xf32>,
    return
  }
  func.func @transform_0(%arg0: i32) -> (i32, i32) {
    %c0_i32 = arith.constant 0 : i32
    %c0_i32_0 = arith.constant 0 : i32
    return %arg0, %c0_i32 : i32, i32
  }
  func.func @transform_1(%arg0: i32) -> (i32, i32) {
    %c0_i32 = arith.constant 0 : i32
    %c0_i32_0 = arith.constant 0 : i32
    return %arg0, %c0_i32 : i32, i32
  }
  func.func @transform_2(%arg0: i32) -> (i32, i32) {
    %c0_i32 = arith.constant 0 : i32
    %c0_i32_0 = arith.constant 0 : i32
    return %arg0, %c0_i32 : i32, i32
  }
  func.func @transform_3(%arg0: i32) -> (i32, i32) {
    %c0_i32 = arith.constant 0 : i32
    %c0_i32_0 = arith.constant 0 : i32
    return %arg0, %c0_i32 : i32, i32
  }
  func.func @transform_4(%arg0: i32) -> (i32, i32) {
    %c0_i32 = arith.constant 0 : i32
    %c0_i32_0 = arith.constant 0 : i32
    %c0_i32_1 = arith.constant 0 : i32
    return %c0_i32, %c0_i32_0 : i32, i32
  }
  func.func @transform_5(%arg0: i32) -> (i32, i32) {
    %c0_i32 = arith.constant 0 : i32
    %c0_i32_0 = arith.constant 0 : i32
    %c0_i32_1 = arith.constant 0 : i32
    return %c0_i32, %c0_i32_0 : i32, i32
  }
  func.func @transform_6(%arg0: i32) -> (i32, i32) {
    %c0_i32 = arith.constant 0 : i32
    %c0_i32_0 = arith.constant 0 : i32
    %c0_i32_1 = arith.constant 0 : i32
    return %c0_i32, %c0_i32_0 : i32, i32
  }
  func.func @transform_7(%arg0: i32) -> (i32, i32) {
    %c0_i32 = arith.constant 0 : i32
    %c0_i32_0 = arith.constant 0 : i32
    %c0_i32_1 = arith.constant 0 : i32
    return %c0_i32, %c0_i32_0 : i32, i32
  }
  func.func @transform_8(%arg0: i32) -> (i32, i32) {
    %c0_i32 = arith.constant 0 : i32
    %c0_i32_0 = arith.constant 0 : i32
    %c0_i32_1 = arith.constant 0 : i32
    return %c0_i32, %c0_i32_0 : i32, i32
  }
  func.func @transform_9(%arg0: i32) -> (i32, i32) {
    %c0_i32 = arith.constant 0 : i32
    %c0_i32_0 = arith.constant 0 : i32
    return %arg0, %c0_i32 : i32, i32
  }
}

module attributes {stable_mosaic.version = 11 : i64} {
  func.func @kernel(%arg0: i32, %arg1: memref<8x64xbf16, #tpu.memory_space<vmem>>, %arg2: memref<8x32xbf16, #tpu.memory_space<vmem>>, %arg3: memref<8x32xbf16, #tpu.memory_space<vmem>>, %arg4: memref<8x32xbf16, #tpu.memory_space<vmem>>, %arg5: memref<64x32xbf16, #tpu.memory_space<vmem>>, %arg6: memref<32x32xbf16, #tpu.memory_space<vmem>>, %arg7: memref<32x32xbf16, #tpu.memory_space<vmem>>, %arg8: memref<32x128xbf16, #tpu.memory_space<vmem>>, %arg9: memref<1x128xf32, #tpu.memory_space<vmem>>, %arg10: memref<8x128xf32, #tpu.memory_space<vmem>>) attributes {dimension_semantics = [#tpu.dimension_semantics<parallel>], iteration_bounds = array<i64: 2>, scalar_prefetch = 0 : i64, scratch_operands = 0 : i64, tpu.core_type = #tpu.core_type<tc>, window_params = [{transform_indices = @transform_0, window_bounds = array<i64: 8, 64>}, {transform_indices = @transform_1, window_bounds = array<i64: 8, 32>}, {transform_indices = @transform_2, window_bounds = array<i64: 8, 32>}, {transform_indices = @transform_3, window_bounds = array<i64: 8, 32>}, {pipeline_mode = #tpu.pipeline_mode<synchronous>, transform_indices = @transform_4, window_bounds = array<i64: 64, 32>}, {pipeline_mode = #tpu.pipeline_mode<synchronous>, transform_indices = @transform_5, window_bounds = array<i64: 32, 32>}, {pipeline_mode = #tpu.pipeline_mode<synchronous>, transform_indices = @transform_6, window_bounds = array<i64: 32, 32>}, {pipeline_mode = #tpu.pipeline_mode<synchronous>, transform_indices = @transform_7, window_bounds = array<i64: 32, 128>}, {pipeline_mode = #tpu.pipeline_mode<synchronous>, transform_indices = @transform_8, window_bounds = array<i64: 1, 128>}, {transform_indices = @transform_9, window_bounds = array<i64: 8, 128>}]} {
    %c0 = arith.constant 0 : index
    %c0_0 = arith.constant 0 : index
    %0 = vector.load %arg1[%c0, %c0_0] : memref<8x64xbf16, #tpu.memory_space<vmem>>, vector<8x64xbf16>
    %c0_1 = arith.constant 0 : index
    %c0_2 = arith.constant 0 : index
    %1 = vector.load %arg5[%c0_1, %c0_2] : memref<64x32xbf16, #tpu.memory_space<vmem>>, vector<64x32xbf16>
    %cst = arith.constant dense<0.000000e+00> : vector<8x32xf32>
    %2 = tpu.matmul %0, %1, %cst {dimension_numbers = #tpu.dot_dimension_numbers<[1], [0], [0], [1], [0, 0, 1, 1], [], []>} : vector<8x64xbf16>, vector<64x32xbf16>, vector<8x32xf32> -> vector<8x32xf32>
    %cst_3 = arith.constant 0.000000e+00 : f32
    %3 = vector.broadcast %cst_3 : f32 to vector<8x32xf32>
    %4 = arith.maximumf %2, %3 : vector<8x32xf32>
    %c0_4 = arith.constant 0 : index
    %c0_5 = arith.constant 0 : index
    %5 = vector.load %arg2[%c0_4, %c0_5] : memref<8x32xbf16, #tpu.memory_space<vmem>>, vector<8x32xbf16>
    %6 = arith.extf %5 : vector<8x32xbf16> to vector<8x32xf32>
    %7 = arith.mulf %4, %6 : vector<8x32xf32>
    %8 = arith.truncf %7 : vector<8x32xf32> to vector<8x32xbf16>
    %c0_6 = arith.constant 0 : index
    %c0_7 = arith.constant 0 : index
    %9 = vector.load %arg6[%c0_6, %c0_7] : memref<32x32xbf16, #tpu.memory_space<vmem>>, vector<32x32xbf16>
    %cst_8 = arith.constant dense<0.000000e+00> : vector<8x32xf32>
    %10 = tpu.matmul %8, %9, %cst_8 {dimension_numbers = #tpu.dot_dimension_numbers<[1], [0], [0], [1], [0, 0, 1, 1], [], []>} : vector<8x32xbf16>, vector<32x32xbf16>, vector<8x32xf32> -> vector<8x32xf32>
    %cst_9 = arith.constant 0.000000e+00 : f32
    %11 = vector.broadcast %cst_9 : f32 to vector<8x32xf32>
    %12 = arith.maximumf %10, %11 : vector<8x32xf32>
    %c0_10 = arith.constant 0 : index
    %c0_11 = arith.constant 0 : index
    %13 = vector.load %arg3[%c0_10, %c0_11] : memref<8x32xbf16, #tpu.memory_space<vmem>>, vector<8x32xbf16>
    %14 = arith.extf %13 : vector<8x32xbf16> to vector<8x32xf32>
    %15 = arith.mulf %12, %14 : vector<8x32xf32>
    %16 = arith.truncf %15 : vector<8x32xf32> to vector<8x32xbf16>
    %c0_12 = arith.constant 0 : index
    %c0_13 = arith.constant 0 : index
    %17 = vector.load %arg7[%c0_12, %c0_13] : memref<32x32xbf16, #tpu.memory_space<vmem>>, vector<32x32xbf16>
    %cst_14 = arith.constant dense<0.000000e+00> : vector<8x32xf32>
    %18 = tpu.matmul %16, %17, %cst_14 {dimension_numbers = #tpu.dot_dimension_numbers<[1], [0], [0], [1], [0, 0, 1, 1], [], []>} : vector<8x32xbf16>, vector<32x32xbf16>, vector<8x32xf32> -> vector<8x32xf32>
    %cst_15 = arith.constant 0.000000e+00 : f32
    %19 = vector.broadcast %cst_15 : f32 to vector<8x32xf32>
    %20 = arith.maximumf %18, %19 : vector<8x32xf32>
    %c0_16 = arith.constant 0 : index
    %c0_17 = arith.constant 0 : index
    %21 = vector.load %arg4[%c0_16, %c0_17] : memref<8x32xbf16, #tpu.memory_space<vmem>>, vector<8x32xbf16>
    %22 = arith.extf %21 : vector<8x32xbf16> to vector<8x32xf32>
    %23 = arith.mulf %20, %22 : vector<8x32xf32>
    %24 = arith.truncf %23 : vector<8x32xf32> to vector<8x32xbf16>
    %c0_18 = arith.constant 0 : index
    %c0_19 = arith.constant 0 : index
    %25 = vector.load %arg8[%c0_18, %c0_19] : memref<32x128xbf16, #tpu.memory_space<vmem>>, vector<32x128xbf16>
    %cst_20 = arith.constant dense<0.000000e+00> : vector<8x128xf32>
    %26 = tpu.matmul %24, %25, %cst_20 {dimension_numbers = #tpu.dot_dimension_numbers<[1], [0], [0], [1], [0, 0, 1, 1], [], []>} : vector<8x32xbf16>, vector<32x128xbf16>, vector<8x128xf32> -> vector<8x128xf32>
    %c0_21 = arith.constant 0 : index
    %c0_22 = arith.constant 0 : index
    %27 = vector.load %arg9[%c0_21, %c0_22] : memref<1x128xf32, #tpu.memory_space<vmem>>, vector<1x128xf32>
    %28 = vector.broadcast %27 : vector<1x128xf32> to vector<8x128xf32>
    %29 = arith.addf %26, %28 : vector<8x128xf32>
    %cst_23 = arith.constant dense<0xFF800000> : vector<8xf32>
    %30 = vector.multi_reduction <maximumf>, %29, %cst_23 [1] : vector<8x128xf32> to vector<8xf32>
    %31 = vector.shape_cast %30 : vector<8xf32> to vector<8x1xf32>
    %32 = vector.broadcast %31 : vector<8x1xf32> to vector<8x128xf32>
    %33 = arith.subf %29, %32 : vector<8x128xf32>
    %34 = math.exp %33 : vector<8x128xf32>
    %cst_24 = arith.constant dense<0.000000e+00> : vector<8xf32>
    %35 = vector.multi_reduction <add>, %34, %cst_24 [1] : vector<8x128xf32> to vector<8xf32>
    %36 = vector.shape_cast %35 : vector<8xf32> to vector<8x1xf32>
    %37 = tpu.reciprocal %36 {approx = true} : vector<8x1xf32> -> vector<8x1xf32>
    %38 = vector.broadcast %37 : vector<8x1xf32> to vector<8x128xf32>
    %39 = arith.mulf %34, %38 : vector<8x128xf32>
    %c0_25 = arith.constant 0 : index
    %c0_26 = arith.constant 0 : index
    %40 = vector.load %arg10[%c0_25, %c0_26] : memref<8x128xf32, #tpu.memory_space<vmem>>, vector<8x128xf32>
    tpu.vector_store %arg10[%c0_25, %c0_26], %39 {strides = array<i32>} : memref<8x128xf32, #tpu.memory_space<vmem>>, vector<8x128xf32>,
    return
  }
  func.func @transform_0(%arg0: i32) -> (i32, i32) {
    %c0_i32 = arith.constant 0 : i32
    %c0_i32_0 = arith.constant 0 : i32
    return %arg0, %c0_i32 : i32, i32
  }
  func.func @transform_1(%arg0: i32) -> (i32, i32) {
    %c0_i32 = arith.constant 0 : i32
    %c0_i32_0 = arith.constant 0 : i32
    return %arg0, %c0_i32 : i32, i32
  }
  func.func @transform_2(%arg0: i32) -> (i32, i32) {
    %c0_i32 = arith.constant 0 : i32
    %c0_i32_0 = arith.constant 0 : i32
    return %arg0, %c0_i32 : i32, i32
  }
  func.func @transform_3(%arg0: i32) -> (i32, i32) {
    %c0_i32 = arith.constant 0 : i32
    %c0_i32_0 = arith.constant 0 : i32
    return %arg0, %c0_i32 : i32, i32
  }
  func.func @transform_4(%arg0: i32) -> (i32, i32) {
    %c0_i32 = arith.constant 0 : i32
    %c0_i32_0 = arith.constant 0 : i32
    %c0_i32_1 = arith.constant 0 : i32
    return %c0_i32, %c0_i32_0 : i32, i32
  }
  func.func @transform_5(%arg0: i32) -> (i32, i32) {
    %c0_i32 = arith.constant 0 : i32
    %c0_i32_0 = arith.constant 0 : i32
    %c0_i32_1 = arith.constant 0 : i32
    return %c0_i32, %c0_i32_0 : i32, i32
  }
  func.func @transform_6(%arg0: i32) -> (i32, i32) {
    %c0_i32 = arith.constant 0 : i32
    %c0_i32_0 = arith.constant 0 : i32
    %c0_i32_1 = arith.constant 0 : i32
    return %c0_i32, %c0_i32_0 : i32, i32
  }
  func.func @transform_7(%arg0: i32) -> (i32, i32) {
    %c0_i32 = arith.constant 0 : i32
    %c0_i32_0 = arith.constant 0 : i32
    %c0_i32_1 = arith.constant 0 : i32
    return %c0_i32, %c0_i32_0 : i32, i32
  }
  func.func @transform_8(%arg0: i32) -> (i32, i32) {
    %c0_i32 = arith.constant 0 : i32
    %c0_i32_0 = arith.constant 0 : i32
    %c0_i32_1 = arith.constant 0 : i32
    return %c0_i32, %c0_i32_0 : i32, i32
  }
  func.func @transform_9(%arg0: i32) -> (i32, i32) {
    %c0_i32 = arith.constant 0 : i32
    %c0_i32_0 = arith.constant 0 : i32
    return %arg0, %c0_i32 : i32, i32
  }
}

</mosaic_0001>

<llo_original>
// kernel: _forward_jit.1
$region0: #{_forward_jit.1}
  #allocation0 [shape = 'u32[]', space=smem, size = 0x4, offset = 0x4, fixed_abs, tag = 'smem constant byte address 0x4 - core index']
  #allocation1 [shape = 'u32[144,128]{1,0:T(1,128)}', space=vmem, size = 0x12000, scoped, tag = 'internal scratch']
  %s0 = inlined_call_operand.vmem [shape: bf16[16,64], index: 0, kind: input, shape index: {}]
  %s1 = inlined_call_operand.vmem [shape: bf16[16,32], index: 1, kind: input, shape index: {}]
  %s2 = inlined_call_operand.vmem [shape: bf16[16,32], index: 2, kind: input, shape index: {}]
  %s3 = inlined_call_operand.vmem [shape: bf16[16,32], index: 3, kind: input, shape index: {}]
  %s4 = inlined_call_operand.vmem [shape: bf16[64,32], index: 4, kind: input, shape index: {}]
  %s5 = inlined_call_operand.vmem [shape: bf16[32,32], index: 5, kind: input, shape index: {}]
  %s6 = inlined_call_operand.vmem [shape: bf16[32,32], index: 6, kind: input, shape index: {}]
  %s7 = inlined_call_operand.vmem [shape: bf16[32,128], index: 7, kind: input, shape index: {}]
  %s8 = inlined_call_operand.vmem [shape: f32[1,128], index: 8, kind: input, shape index: {}]
  %s9 = inlined_call_operand.hbm [shape: f32[16,128], index: 9, kind: output, shape index: {}]
  %s10 = sld [smem:[#allocation0]]
  $region69: #{_forward_jit.1} parent=0
    _
  %s12 = ssub.s32 1, %s10
  %s13 = scalar_select 0, %s12, %s10
  $region1: #{_forward_jit.1} parent=0
    #allocation2 [shape = 'u8[8192]{0}', space=vmem, size = 0x2000, scoped, tag = 'output window, operand 0']
    #allocation3 [shape = 's32[2]{0}', space=sflag, size = 0x8, scoped, tag = 'scoped memory for _forward_jit.1']
    %14 = vsyncpa [#allocation3], 0
    %s15 = scalar_lea.sflag [#allocation3], 1
    %16 = vsyncpa %s15, 0
    loop: start=0, step=1, limit=4
    $region2: #{_forward_jit.1} parent=1 // loop_pre_header
      _
    $region3: #{_forward_jit.1} parent=1 // loop_header
      %s18 = sphi 0, %s22
      %p19 = scmp.ge.s32.totalorder %s18, 4
      %s28 = sphi 0, %s30
      %s31 = sphi 0, %s28
      %s32 = sphi 0, %s31
      %s48 = sphi 0, %s32
      %s54 = sphi 0, %s56
      %s57 = sphi 0, %s54
      %s58 = sphi 0, %s57
      %s74 = sphi 0, %s58
      %s80 = sphi 0, %s82
      %s83 = sphi 0, %s80
      %s84 = sphi 0, %s83
      %s100 = sphi 0, %s84
      %s106 = sphi 0, %s108
      %s109 = sphi 0, %s106
      %s110 = sphi 0, %s109
      %s126 = sphi 0, %s110
      %s130 = sphi 0, %s130
      %s132 = sphi 0, %s130
      %s133 = sphi 0, %s132
      %s147 = sphi 0, %s133
      %s151 = sphi 0, %s151
      %s153 = sphi 0, %s151
      %s154 = sphi 0, %s153
      %s168 = sphi 0, %s154
      %s172 = sphi 0, %s172
      %s174 = sphi 0, %s172
      %s175 = sphi 0, %s174
      %s189 = sphi 0, %s175
      %s193 = sphi 0, %s193
      %s195 = sphi 0, %s193
      %s196 = sphi 0, %s195
      %s210 = sphi 0, %s196
      %s214 = sphi 0, %s214
      %s216 = sphi 0, %s214
      %s217 = sphi 0, %s216
      %s231 = sphi 0, %s217
      %s237 = sphi 0, %s239
      %s240 = sphi 0, %s237
      %s241 = sphi 0, %s240
      %s257 = sphi 0, %s241
    $region4: #{_forward_jit.1} parent=1 // loop_header_branch
      %21 = sbr.rel (%p19) target = $region8
    $region5: #{_forward_jit.1} parent=1 // loop_body
      %s23 = ssub.s32 %s18, 1
      %s24 = ssub.s32 %s18, 2
      %s25 = sadd.s32 %s18, 1
      %s26 = ssub.s32 %s18, %s25
      %p27 = scmp.eq.s32.totalorder %s26, 0
      %s29 = sadd.s32 %s28, 1
      %s30 = scalar_select %p27, %s28, %s29
      %p33 = pneg %p27
      %p34 = scmp.eq.s32.totalorder %s18, 1
      %p35 = por %p33, %p34
      %p36 = scmp.ne.s32.totalorder %s28, %s31
      %p37 = scmp.eq.s32.totalorder %s18, 0
      %p38 = por %p36, %p37
      %p39 = scmp.ne.s32.totalorder %s28, %s31
      %p40 = scmp.eq.s32.totalorder %s23, 1
      %p41 = por %p39, %p40
      %p42 = scmp.ne.s32.totalorder %s31, %s32
      %p43 = scmp.eq.s32.totalorder %s23, 0
      %p44 = por %p42, %p43
      %p45 = scmp.ne.s32.totalorder %s31, %s32
      %p46 = scmp.eq.s32.totalorder %s24, 1
      %p47 = por %p45, %p46
      %p49 = scmp.ne.s32.totalorder %s32, %s48
      %p50 = scmp.eq.s32.totalorder %s24, 0
      %p51 = por %p49, %p50
      %s52 = ssub.s32 %s18, %s25
      %p53 = scmp.eq.s32.totalorder %s52, 0
      %s55 = sadd.s32 %s54, 1
      %s56 = scalar_select %p53, %s54, %s55
      %p59 = pneg %p53
      %p60 = scmp.eq.s32.totalorder %s18, 1
      %p61 = por %p59, %p60
      %p62 = scmp.ne.s32.totalorder %s54, %s57
      %p63 = scmp.eq.s32.totalorder %s18, 0
      %p64 = por %p62, %p63
      %p65 = scmp.ne.s32.totalorder %s54, %s57
      %p66 = scmp.eq.s32.totalorder %s23, 1
      %p67 = por %p65, %p66
      %p68 = scmp.ne.s32.totalorder %s57, %s58
      %p69 = scmp.eq.s32.totalorder %s23, 0
      %p70 = por %p68, %p69
      %p71 = scmp.ne.s32.totalorder %s57, %s58
      %p72 = scmp.eq.s32.totalorder %s24, 1
      %p73 = por %p71, %p72
      %p75 = scmp.ne.s32.totalorder %s58, %s74
      %p76 = scmp.eq.s32.totalorder %s24, 0
      %p77 = por %p75, %p76
      %s78 = ssub.s32 %s18, %s25
      %p79 = scmp.eq.s32.totalorder %s78, 0
      %s81 = sadd.s32 %s80, 1
      %s82 = scalar_select %p79, %s80, %s81
      %p85 = pneg %p79
      %p86 = scmp.eq.s32.totalorder %s18, 1
      %p87 = por %p85, %p86
      %p88 = scmp.ne.s32.totalorder %s80, %s83
      %p89 = scmp.eq.s32.totalorder %s18, 0
      %p90 = por %p88, %p89
      %p91 = scmp.ne.s32.totalorder %s80, %s83
      %p92 = scmp.eq.s32.totalorder %s23, 1
      %p93 = por %p91, %p92
      %p94 = scmp.ne.s32.totalorder %s83, %s84
      %p95 = scmp.eq.s32.totalorder %s23, 0
      %p96 = por %p94, %p95
      %p97 = scmp.ne.s32.totalorder %s83, %s84
      %p98 = scmp.eq.s32.totalorder %s24, 1
      %p99 = por %p97, %p98
      %p101 = scmp.ne.s32.totalorder %s84, %s100
      %p102 = scmp.eq.s32.totalorder %s24, 0
      %p103 = por %p101, %p102
      %s104 = ssub.s32 %s18, %s25
      %p105 = scmp.eq.s32.totalorder %s104, 0
      %s107 = sadd.s32 %s106, 1
      %s108 = scalar_select %p105, %s106, %s107
      %p111 = pneg %p105
      %p112 = scmp.eq.s32.totalorder %s18, 1
      %p113 = por %p111, %p112
      %p114 = scmp.ne.s32.totalorder %s106, %s109
      %p115 = scmp.eq.s32.totalorder %s18, 0
      %p116 = por %p114, %p115
      %p117 = scmp.ne.s32.totalorder %s106, %s109
      %p118 = scmp.eq.s32.totalorder %s23, 1
      %p119 = por %p117, %p118
      %p120 = scmp.ne.s32.totalorder %s109, %s110
      %p121 = scmp.eq.s32.totalorder %s23, 0
      %p122 = por %p120, %p121
      %p123 = scmp.ne.s32.totalorder %s109, %s110
      %p124 = scmp.eq.s32.totalorder %s24, 1
      %p125 = por %p123, %p124
      %p127 = scmp.ne.s32.totalorder %s110, %s126
      %p128 = scmp.eq.s32.totalorder %s24, 0
      %p129 = por %p127, %p128
      %s131 = sadd.s32 %s130, 1
      %p134 = scmp.eq.s32.totalorder %s18, 1
      %p135 = scmp.ne.s32.totalorder %s130, %s132
      %p136 = scmp.eq.s32.totalorder %s18, 0
      %p137 = por %p135, %p136
      %p138 = scmp.ne.s32.totalorder %s130, %s132
      %p139 = scmp.eq.s32.totalorder %s23, 1
      %p140 = por %p138, %p139
      %p141 = scmp.ne.s32.totalorder %s132, %s133
      %p142 = scmp.eq.s32.totalorder %s23, 0
      %p143 = por %p141, %p142
      %p144 = scmp.ne.s32.totalorder %s132, %s133
      %p145 = scmp.eq.s32.totalorder %s24, 1
      %p146 = por %p144, %p145
      %p148 = scmp.ne.s32.totalorder %s133, %s147
      %p149 = scmp.eq.s32.totalorder %s24, 0
      %p150 = por %p148, %p149
      %s152 = sadd.s32 %s151, 1
      %p155 = scmp.eq.s32.totalorder %s18, 1
      %p156 = scmp.ne.s32.totalorder %s151, %s153
      %p157 = scmp.eq.s32.totalorder %s18, 0
      %p158 = por %p156, %p157
      %p159 = scmp.ne.s32.totalorder %s151, %s153
      %p160 = scmp.eq.s32.totalorder %s23, 1
      %p161 = por %p159, %p160
      %p162 = scmp.ne.s32.totalorder %s153, %s154
      %p163 = scmp.eq.s32.totalorder %s23, 0
      %p164 = por %p162, %p163
      %p165 = scmp.ne.s32.totalorder %s153, %s154
      %p166 = scmp.eq.s32.totalorder %s24, 1
      %p167 = por %p165, %p166
      %p169 = scmp.ne.s32.totalorder %s154, %s168
      %p170 = scmp.eq.s32.totalorder %s24, 0
      %p171 = por %p169, %p170
      %s173 = sadd.s32 %s172, 1
      %p176 = scmp.eq.s32.totalorder %s18, 1
      %p177 = scmp.ne.s32.totalorder %s172, %s174
      %p178 = scmp.eq.s32.totalorder %s18, 0
      %p179 = por %p177, %p178
      %p180 = scmp.ne.s32.totalorder %s172, %s174
      %p181 = scmp.eq.s32.totalorder %s23, 1
      %p182 = por %p180, %p181
      %p183 = scmp.ne.s32.totalorder %s174, %s175
      %p184 = scmp.eq.s32.totalorder %s23, 0
      %p185 = por %p183, %p184
      %p186 = scmp.ne.s32.totalorder %s174, %s175
      %p187 = scmp.eq.s32.totalorder %s24, 1
      %p188 = por %p186, %p187
      %p190 = scmp.ne.s32.totalorder %s175, %s189
      %p191 = scmp.eq.s32.totalorder %s24, 0
      %p192 = por %p190, %p191
      %s194 = sadd.s32 %s193, 1
      %p197 = scmp.eq.s32.totalorder %s18, 1
      %p198 = scmp.ne.s32.totalorder %s193, %s195
      %p199 = scmp.eq.s32.totalorder %s18, 0
      %p200 = por %p198, %p199
      %p201 = scmp.ne.s32.totalorder %s193, %s195
      %p202 = scmp.eq.s32.totalorder %s23, 1
      %p203 = por %p201, %p202
      %p204 = scmp.ne.s32.totalorder %s195, %s196
      %p205 = scmp.eq.s32.totalorder %s23, 0
      %p206 = por %p204, %p205
      %p207 = scmp.ne.s32.totalorder %s195, %s196
      %p208 = scmp.eq.s32.totalorder %s24, 1
      %p209 = por %p207, %p208
      %p211 = scmp.ne.s32.totalorder %s196, %s210
      %p212 = scmp.eq.s32.totalorder %s24, 0
      %p213 = por %p211, %p212
      %s215 = sadd.s32 %s214, 1
      %p218 = scmp.eq.s32.totalorder %s18, 1
      %p219 = scmp.ne.s32.totalorder %s214, %s216
      %p220 = scmp.eq.s32.totalorder %s18, 0
      %p221 = por %p219, %p220
      %p222 = scmp.ne.s32.totalorder %s214, %s216
      %p223 = scmp.eq.s32.totalorder %s23, 1
      %p224 = por %p222, %p223
      %p225 = scmp.ne.s32.totalorder %s216, %s217
      %p226 = scmp.eq.s32.totalorder %s23, 0
      %p227 = por %p225, %p226
      %p228 = scmp.ne.s32.totalorder %s216, %s217
      %p229 = scmp.eq.s32.totalorder %s24, 1
      %p230 = por %p228, %p229
      %p232 = scmp.ne.s32.totalorder %s217, %s231
      %p233 = scmp.eq.s32.totalorder %s24, 0
      %p234 = por %p232, %p233
      %s235 = ssub.s32 %s18, %s25
      %p236 = scmp.eq.s32.totalorder %s235, 0
      %s238 = sadd.s32 %s237, 1
      %s239 = scalar_select %p236, %s237, %s238
      %p242 = pneg %p236
      %p243 = scmp.eq.s32.totalorder %s18, 1
      %p244 = por %p242, %p243
      %p245 = scmp.ne.s32.totalorder %s237, %s240
      %p246 = scmp.eq.s32.totalorder %s18, 0
      %p247 = por %p245, %p246
      %p248 = scmp.ne.s32.totalorder %s237, %s240
      %p249 = scmp.eq.s32.totalorder %s23, 1
      %p250 = por %p248, %p249
      %p251 = scmp.ne.s32.totalorder %s240, %s241
      %p252 = scmp.eq.s32.totalorder %s23, 0
      %p253 = por %p251, %p252
      %p254 = scmp.ne.s32.totalorder %s240, %s241
      %p255 = scmp.eq.s32.totalorder %s24, 1
      %p256 = por %p254, %p255
      %p258 = scmp.ne.s32.totalorder %s241, %s257
      %p259 = scmp.eq.s32.totalorder %s24, 0
      %p260 = por %p258, %p259
      %p261 = scmp.le.s32.totalorder 1, %s18
      %p262 = scmp.lt.s32.totalorder %s18, 3
      %p263 = pnand %p261, %p262
      %p264 = pneg %p263
      // Predicated region
      $region9: #{_forward_jit.1} parent=5 // pred_check
        _
      $region10: #{_forward_jit.1} parent=5 // pred_check_branch
        %266 = sbr.rel (%p263) target = $region12
      $region11: #{_forward_jit.1} parent=5 // pred_region
        %s267 = ssub.s32 %s18, 1
        // Predicated region
        $region13: #{_forward_jit.1} parent=11 // pred_check
          %p268 = pneg %p143
        $region14: #{_forward_jit.1} parent=11 // pred_check_branch
          %270 = sbr.rel (%p268) target = $region16
        $region15: #{_forward_jit.1} parent=11 // pred_region
          _
        $region16: #{_forward_jit.1} parent=11 // pred_fallthru
          _
        // Predicated region
        $region17: #{_forward_jit.1} parent=11 // pred_check
          %p271 = pneg %p164
        $region18: #{_forward_jit.1} parent=11 // pred_check_branch
          %273 = sbr.rel (%p271) target = $region20
        $region19: #{_forward_jit.1} parent=11 // pred_region
          _
        $region20: #{_forward_jit.1} parent=11 // pred_fallthru
          _
        // Predicated region
        $region21: #{_forward_jit.1} parent=11 // pred_check
          %p274 = pneg %p185
        $region22: #{_forward_jit.1} parent=11 // pred_check_branch
          %276 = sbr.rel (%p274) target = $region24
        $region23: #{_forward_jit.1} parent=11 // pred_region
          _
        $region24: #{_forward_jit.1} parent=11 // pred_fallthru
          _
        // Predicated region
        $region25: #{_forward_jit.1} parent=11 // pred_check
          %p277 = pneg %p206
        $region26: #{_forward_jit.1} parent=11 // pred_check_branch
          %279 = sbr.rel (%p277) target = $region28
        $region27: #{_forward_jit.1} parent=11 // pred_region
          _
        $region28: #{_forward_jit.1} parent=11 // pred_fallthru
          _
        // Predicated region
        $region29: #{_forward_jit.1} parent=11 // pred_check
          %p280 = pneg %p227
        $region30: #{_forward_jit.1} parent=11 // pred_check_branch
          %282 = sbr.rel (%p280) target = $region32
        $region31: #{_forward_jit.1} parent=11 // pred_region
          _
        $region32: #{_forward_jit.1} parent=11 // pred_fallthru
          _
      $region12: #{_forward_jit.1} parent=5 // pred_fallthru
        _
      %p283 = scmp.lt.s32.totalorder %s18, 2
      // Predicated region
      $region33: #{_forward_jit.1} parent=5 // pred_check
        %p284 = pneg %p283
      $region34: #{_forward_jit.1} parent=5 // pred_check_branch
        %286 = sbr.rel (%p284) target = $region36
      $region35: #{_forward_jit.1} parent=5 // pred_region
        // Predicated region
        $region37: #{_forward_jit.1} parent=35 // pred_check
          %p287 = pneg %p38
        $region38: #{_forward_jit.1} parent=35 // pred_check_branch
          %289 = sbr.rel (%p287) target = $region40
        $region39: #{_forward_jit.1} parent=35 // pred_region
          %p290 = scmp.lt.s32.totalorder %s18, 1
          %s291 = scalar_select %p290, %s18, 1
          %s292 = smul.addr %s291, 4
          %s293 = scalar_lea.vmem %s0, %s292
        $region40: #{_forward_jit.1} parent=35 // pred_fallthru
          _
        // Predicated region
        $region41: #{_forward_jit.1} parent=35 // pred_check
          %p294 = pneg %p64
        $region42: #{_forward_jit.1} parent=35 // pred_check_branch
          %296 = sbr.rel (%p294) target = $region44
        $region43: #{_forward_jit.1} parent=35 // pred_region
          %p297 = scmp.lt.s32.totalorder %s18, 1
          %s298 = scalar_select %p297, %s18, 1
          %s299 = smul.addr %s298, 4
          %s300 = scalar_lea.vmem %s1, %s299
        $region44: #{_forward_jit.1} parent=35 // pred_fallthru
          _
        // Predicated region
        $region45: #{_forward_jit.1} parent=35 // pred_check
          %p301 = pneg %p90
        $region46: #{_forward_jit.1} parent=35 // pred_check_branch
          %303 = sbr.rel (%p301) target = $region48
        $region47: #{_forward_jit.1} parent=35 // pred_region
          %p304 = scmp.lt.s32.totalorder %s18, 1
          %s305 = scalar_select %p304, %s18, 1
          %s306 = smul.addr %s305, 4
          %s307 = scalar_lea.vmem %s2, %s306
        $region48: #{_forward_jit.1} parent=35 // pred_fallthru
          _
        // Predicated region
        $region49: #{_forward_jit.1} parent=35 // pred_check
          %p308 = pneg %p116
        $region50: #{_forward_jit.1} parent=35 // pred_check_branch
          %310 = sbr.rel (%p308) target = $region52
        $region51: #{_forward_jit.1} parent=35 // pred_region
          %p311 = scmp.lt.s32.totalorder %s18, 1
          %s312 = scalar_select %p311, %s18, 1
          %s313 = smul.addr %s312, 4
          %s314 = scalar_lea.vmem %s3, %s313
        $region52: #{_forward_jit.1} parent=35 // pred_fallthru
          _
      $region36: #{_forward_jit.1} parent=5 // pred_fallthru
        _
      %p315 = scmp.le.s32.totalorder 1, %s18
      %p316 = scmp.lt.s32.totalorder %s18, 3
      %p317 = pnand %p315, %p316
      %p318 = pneg %p317
      // Predicated region
      $region53: #{_forward_jit.1} parent=5 // pred_check
        _
      $region54: #{_forward_jit.1} parent=5 // pred_check_branch
        %320 = sbr.rel (%p317) target = $region56
      $region55: #{_forward_jit.1} parent=5 // pred_region
        %s321 = ssub.s32 %s18, 1
        %p322 = scmp.lt.s32.totalorder %s23, 1
        %s323 = scalar_select %p322, %s23, 1
        %s324 = smul.addr %s323, 4
        %s325 = scalar_lea.vmem %s0, %s324
        %p326 = pneg %p44
        %p327 = pneg %p41
        %p328 = scmp.lt.s32.totalorder %s23, 1
        %s329 = scalar_select %p328, %s23, 1
        %s330 = smul.addr %s329, 4
        %s331 = scalar_lea.vmem %s1, %s330
        %p332 = pneg %p70
        %p333 = pneg %p67
        %p334 = scmp.lt.s32.totalorder %s23, 1
        %s335 = scalar_select %p334, %s23, 1
        %s336 = smul.addr %s335, 4
        %s337 = scalar_lea.vmem %s2, %s336
        %p338 = pneg %p96
        %p339 = pneg %p93
        %p340 = scmp.lt.s32.totalorder %s23, 1
        %s341 = scalar_select %p340, %s23, 1
        %s342 = smul.addr %s341, 4
        %s343 = scalar_lea.vmem %s3, %s342
        %p344 = pneg %p122
        %p345 = pneg %p119
        %p346 = pneg %p143
        %p347 = pneg %p140
        %p348 = pneg %p164
        %p349 = pneg %p161
        %p350 = pneg %p185
        %p351 = pneg %p182
        %p352 = pneg %p206
        %p353 = pneg %p203
        %p354 = pneg %p227
        %p355 = pneg %p224
        %p356 = pneg %p253
        %p357 = pneg %p250
        %s358 = sand.u32 %s240, 1
        %s359 = scalar_lea.sflag [#allocation3], %s358
        %s360 = sand.u32 %s240, 1
        %s361 = smul.addr %s360, 8
        %s362 = scalar_lea.vmem [#allocation2], %s361
        %p363 = scmp.lt.s32.totalorder %s23, 1
        %s364 = scalar_select %p363, %s23, 1
        %s365 = smul.addr %s364, 4
        %s366 = scalar_lea.vmem %s0, %s365
        %p367 = scmp.lt.s32.totalorder %s23, 1
        %s368 = scalar_select %p367, %s23, 1
        %s369 = smul.addr %s368, 4
        %s370 = scalar_lea.vmem %s1, %s369
        %p371 = scmp.lt.s32.totalorder %s23, 1
        %s372 = scalar_select %p371, %s23, 1
        %s373 = smul.addr %s372, 4
        %s374 = scalar_lea.vmem %s2, %s373
        %p375 = scmp.lt.s32.totalorder %s23, 1
        %s376 = scalar_select %p375, %s23, 1
        %s377 = smul.addr %s376, 4
        %s378 = scalar_lea.vmem %s3, %s377
        %v380 = vld [vmem:[%s366] sm:$0xf]
        %v381 = vld [vmem:[%s4] sm:$0xf]
        %v382 = vld [vmem:[%s4 + $0x4] sm:$0xf]
        %v383 = vld [vmem:[%s4 + $0x8] sm:$0xf]
        %v384 = vld [vmem:[%s4 + $0xc] sm:$0xf]
        %v385 = vld [vmem:[%s4 + $0x10] sm:$0xf]
        %v386 = vld [vmem:[%s4 + $0x14] sm:$0xf]
        %v387 = vld [vmem:[%s4 + $0x18] sm:$0xf]
        %v388 = vld [vmem:[%s4 + $0x1c] sm:$0xf]
        %v397 = vunpack.c.l.b16 %v381
        %v398 = vunpack.c.l.b16 %v382
        %v399 = vunpack.c.l.b16 %v383
        %v400 = vunpack.c.l.b16 %v384
        %v401 = vunpack.c.l.b16 %v385
        %v402 = vunpack.c.l.b16 %v386
        %v403 = vunpack.c.l.b16 %v387
        %v404 = vunpack.c.l.b16 %v388
        %v405 = vpack.c.b16 %v398, %v397
        %v406 = vpack.c.b16 %v400, %v399
        %v407 = vpack.c.b16 %v402, %v401
        %v408 = vpack.c.b16 %v404, %v403
        %vm413 = vcmask 523264
        %v415 = vsel %vm413, %v380, 0
        %417 = vmatprep.subr.bf16.mxu0 0
        %418 = vmatpush1.bf16.msra.mxu0 %v405
        %419 = vmatprep.subr.bf16.mxu0 0
        %420 = vmatpush1.bf16.msra.mxu0 %v406
        %421 = vmatprep.subr.bf16.mxu0 0
        %422 = vmatpush1.bf16.msra.mxu0 %v407
        %423 = vmatprep.subr.bf16.mxu0 0
        %424 = vmatpush1.bf16.msra.mxu0 %v408
        %425 = vmatprep.subr.bf16.mxu0 0
        %426 = vmatpush1.bf16.msra.mxu0 0
        %427 = vmatprep.subr.bf16.mxu0 0
        %428 = vmatpush1.bf16.msra.mxu0 0
        %429 = vmatprep.subr.bf16.mxu0 0
        %430 = vmatpush1.bf16.msra.mxu0 0
        %431 = vmatprep.subr.bf16.mxu0 0
        %432 = vmatpush1.bf16.msra.mxu0 0
        %433 = vmatprep.subr.bf16.mxu0 0
        %434 = vmatpush1.bf16.msra.mxu0 0
        %435 = vmatprep.subr.bf16.mxu0 0
        %436 = vmatpush1.bf16.msra.mxu0 0
        %437 = vmatprep.subr.bf16.mxu0 0
        %438 = vmatpush1.bf16.msra.mxu0 0
        %439 = vmatprep.subr.bf16.mxu0 0
        %440 = vmatpush1.bf16.msra.mxu0 0
        %441 = vmatprep.subr.bf16.mxu0 0
        %442 = vmatpush1.bf16.msra.mxu0 0
        %443 = vmatprep.subr.bf16.mxu0 0
        %444 = vmatpush1.bf16.msra.mxu0 0
        %445 = vmatprep.subr.bf16.mxu0 0
        %446 = vmatpush1.bf16.msra.mxu0 0
        %447 = vmatprep.subr.bf16.mxu0 0
        %448 = vmatpush1.bf16.msra.mxu0 0
        %449 = vmatprep.mubr.bf16.mxu0 0
        %450 = vmatmul.mubr.bf16.gmra.mrb[0].mxu0 %v415
        %v451 = vpop.f32.mrb[0].mxu0
        %v452 = vadd.f32 0.0, %v451
        %v453 = vpop.f32.mrb[0].mxu0
        %v454 = vpop.f32.mrb[0].mxu0
        %v455 = vpop.f32.mrb[0].mxu0
        %456 = vdwg.mxu0
        %v457 = vmax.f32 %v452, 0.0
        %v458 = vld [vmem:[%s370] sm:$0xf]
        %v459 = vunpack.c.l.bf16 %v458
        %v460 = vmul.f32 %v457, %v459
        %v461 = vpack.c.bf16 %v460, %v460
        %v462 = vld [vmem:[%s5] sm:$0xf]
        %v463 = vld [vmem:[%s5 + $0x4] sm:$0xf]
        %v464 = vld [vmem:[%s5 + $0x8] sm:$0xf]
        %v465 = vld [vmem:[%s5 + $0xc] sm:$0xf]
        %v470 = vunpack.c.l.b16 %v462
        %v471 = vunpack.c.l.b16 %v463
        %v472 = vunpack.c.l.b16 %v464
        %v473 = vunpack.c.l.b16 %v465
        %v474 = vpack.c.b16 %v471, %v470
        %v475 = vpack.c.b16 %v473, %v472
        %vm478 = vcmask 261120
        %v480 = vsel %vm478, %v461, 0
        %482 = vmatprep.subr.bf16.mxu0 0
        %483 = vmatpush1.bf16.msra.mxu0 %v474
        %484 = vmatprep.subr.bf16.mxu0 0
        %485 = vmatpush1.bf16.msra.mxu0 %v475
        %486 = vmatprep.subr.bf16.mxu0 0
        %487 = vmatpush1.bf16.msra.mxu0 0
        %488 = vmatprep.subr.bf16.mxu0 0
        %489 = vmatpush1.bf16.msra.mxu0 0
        %490 = vmatprep.subr.bf16.mxu0 0
        %491 = vmatpush1.bf16.msra.mxu0 0
        %492 = vmatprep.subr.bf16.mxu0 0
        %493 = vmatpush1.bf16.msra.mxu0 0
        %494 = vmatprep.subr.bf16.mxu0 0
        %495 = vmatpush1.bf16.msra.mxu0 0
        %496 = vmatprep.subr.bf16.mxu0 0
        %497 = vmatpush1.bf16.msra.mxu0 0
        %498 = vmatprep.subr.bf16.mxu0 0
        %499 = vmatpush1.bf16.msra.mxu0 0
        %500 = vmatprep.subr.bf16.mxu0 0
        %501 = vmatpush1.bf16.msra.mxu0 0
        %502 = vmatprep.subr.bf16.mxu0 0
        %503 = vmatpush1.bf16.msra.mxu0 0
        %504 = vmatprep.subr.bf16.mxu0 0
        %505 = vmatpush1.bf16.msra.mxu0 0
        %506 = vmatprep.subr.bf16.mxu0 0
        %507 = vmatpush1.bf16.msra.mxu0 0
        %508 = vmatprep.subr.bf16.mxu0 0
        %509 = vmatpush1.bf16.msra.mxu0 0
        %510 = vmatprep.subr.bf16.mxu0 0
        %511 = vmatpush1.bf16.msra.mxu0 0
        %512 = vmatprep.subr.bf16.mxu0 0
        %513 = vmatpush1.bf16.msra.mxu0 0
        %514 = vmatprep.mubr.bf16.mxu0 0
        %515 = vmatmul.mubr.bf16.gmra.mrb[0].mxu0 %v480
        %v516 = vpop.f32.mrb[0].mxu0
        %v517 = vadd.f32 0.0, %v516
        %v518 = vpop.f32.mrb[0].mxu0
        %v519 = vpop.f32.mrb[0].mxu0
        %v520 = vpop.f32.mrb[0].mxu0
        %521 = vdwg.mxu0
        %v522 = vmax.f32 %v517, 0.0
        %v523 = vld [vmem:[%s374] sm:$0xf]
        %v524 = vunpack.c.l.bf16 %v523
        %v525 = vmul.f32 %v522, %v524
        %v526 = vpack.c.bf16 %v525, %v525
        %v527 = vld [vmem:[%s6] sm:$0xf]
        %v528 = vld [vmem:[%s6 + $0x4] sm:$0xf]
        %v529 = vld [vmem:[%s6 + $0x8] sm:$0xf]
        %v530 = vld [vmem:[%s6 + $0xc] sm:$0xf]
        %v535 = vunpack.c.l.b16 %v527
        %v536 = vunpack.c.l.b16 %v528
        %v537 = vunpack.c.l.b16 %v529
        %v538 = vunpack.c.l.b16 %v530
        %v539 = vpack.c.b16 %v536, %v535
        %v540 = vpack.c.b16 %v538, %v537
        %v544 = vsel %vm478, %v526, 0
        %546 = vmatprep.subr.bf16.mxu0 0
        %547 = vmatpush1.bf16.msra.mxu0 %v539
        %548 = vmatprep.subr.bf16.mxu0 0
        %549 = vmatpush1.bf16.msra.mxu0 %v540
        %550 = vmatprep.subr.bf16.mxu0 0
        %551 = vmatpush1.bf16.msra.mxu0 0
        %552 = vmatprep.subr.bf16.mxu0 0
        %553 = vmatpush1.bf16.msra.mxu0 0
        %554 = vmatprep.subr.bf16.mxu0 0
        %555 = vmatpush1.bf16.msra.mxu0 0
        %556 = vmatprep.subr.bf16.mxu0 0
        %557 = vmatpush1.bf16.msra.mxu0 0
        %558 = vmatprep.subr.bf16.mxu0 0
        %559 = vmatpush1.bf16.msra.mxu0 0
        %560 = vmatprep.subr.bf16.mxu0 0
        %561 = vmatpush1.bf16.msra.mxu0 0
        %562 = vmatprep.subr.bf16.mxu0 0
        %563 = vmatpush1.bf16.msra.mxu0 0
        %564 = vmatprep.subr.bf16.mxu0 0
        %565 = vmatpush1.bf16.msra.mxu0 0
        %566 = vmatprep.subr.bf16.mxu0 0
        %567 = vmatpush1.bf16.msra.mxu0 0
        %568 = vmatprep.subr.bf16.mxu0 0
        %569 = vmatpush1.bf16.msra.mxu0 0
        %570 = vmatprep.subr.bf16.mxu0 0
        %571 = vmatpush1.bf16.msra.mxu0 0
        %572 = vmatprep.subr.bf16.mxu0 0
        %573 = vmatpush1.bf16.msra.mxu0 0
        %574 = vmatprep.subr.bf16.mxu0 0
        %575 = vmatpush1.bf16.msra.mxu0 0
        %576 = vmatprep.subr.bf16.mxu0 0
        %577 = vmatpush1.bf16.msra.mxu0 0
        %578 = vmatprep.mubr.bf16.mxu0 0
        %579 = vmatmul.mubr.bf16.gmra.mrb[0].mxu0 %v544
        %v580 = vpop.f32.mrb[0].mxu0
        %v581 = vadd.f32 0.0, %v580
        %v582 = vpop.f32.mrb[0].mxu0
        %v583 = vpop.f32.mrb[0].mxu0
        %v584 = vpop.f32.mrb[0].mxu0
        %585 = vdwg.mxu0
        %v586 = vmax.f32 %v581, 0.0
        %v587 = vld [vmem:[%s378] sm:$0xf]
        %v588 = vunpack.c.l.bf16 %v587
        %v589 = vmul.f32 %v586, %v588
        %v590 = vpack.c.bf16 %v589, %v589
        %v591 = vld [vmem:[%s7] sm:$0xf]
        %v592 = vld [vmem:[%s7 + $0x4] sm:$0xf]
        %v593 = vld [vmem:[%s7 + $0x8] sm:$0xf]
        %v594 = vld [vmem:[%s7 + $0xc] sm:$0xf]
        %v595 = vld [vmem:[%s8] sm:$0x1]
        %v597 = vlaneseq
        %v598 = vshrl.u32 %v597, 7
        %v599 = vsub.s32 0, %v598
        %v600 = vrot.slane %v595, %v599
        %v606 = vunpack.c.l.b16 %v591
        %v607 = vunpack.c.l.b16 %v592
        %v608 = vunpack.c.l.b16 %v593
        %v609 = vunpack.c.l.b16 %v594
        %v610 = vpack.c.b16 %v607, %v606
        %v611 = vpack.c.b16 %v609, %v608
        %v615 = vsel %vm478, %v590, 0
        %617 = vmatprep.subr.bf16.mxu0 0
        %618 = vmatpush1.bf16.msra.mxu0 %v610
        %619 = vmatprep.subr.bf16.mxu0 0
        %620 = vmatpush1.bf16.msra.mxu0 %v611
        %621 = vmatprep.subr.bf16.mxu0 0
        %622 = vmatpush1.bf16.msra.mxu0 0
        %623 = vmatprep.subr.bf16.mxu0 0
        %624 = vmatpush1.bf16.msra.mxu0 0
        %625 = vmatprep.subr.bf16.mxu0 0
        %626 = vmatpush1.bf16.msra.mxu0 0
        %627 = vmatprep.subr.bf16.mxu0 0
        %628 = vmatpush1.bf16.msra.mxu0 0
        %629 = vmatprep.subr.bf16.mxu0 0
        %630 = vmatpush1.bf16.msra.mxu0 0
        %631 = vmatprep.subr.bf16.mxu0 0
        %632 = vmatpush1.bf16.msra.mxu0 0
        %633 = vmatprep.subr.bf16.mxu0 0
        %634 = vmatpush1.bf16.msra.mxu0 0
        %635 = vmatprep.subr.bf16.mxu0 0
        %636 = vmatpush1.bf16.msra.mxu0 0
        %637 = vmatprep.subr.bf16.mxu0 0
        %638 = vmatpush1.bf16.msra.mxu0 0
        %639 = vmatprep.subr.bf16.mxu0 0
        %640 = vmatpush1.bf16.msra.mxu0 0
        %641 = vmatprep.subr.bf16.mxu0 0
        %642 = vmatpush1.bf16.msra.mxu0 0
        %643 = vmatprep.subr.bf16.mxu0 0
        %644 = vmatpush1.bf16.msra.mxu0 0
        %645 = vmatprep.subr.bf16.mxu0 0
        %646 = vmatpush1.bf16.msra.mxu0 0
        %647 = vmatprep.subr.bf16.mxu0 0
        %648 = vmatpush1.bf16.msra.mxu0 0
        %649 = vmatprep.mubr.bf16.mxu0 0
        %650 = vmatmul.mubr.bf16.gmra.mrb[0].mxu0 %v615
        %v651 = vpop.f32.mrb[0].mxu0
        %v652 = vadd.f32 %v600, %v651
        %v653 = vpop.f32.mrb[0].mxu0
        %v654 = vpop.f32.mrb[0].mxu0
        %v655 = vpop.f32.mrb[0].mxu0
        %656 = vdwg.mxu0
        %657 = vmax.xlane.f32.xlu0 %v652
        %v658 = vpop.xlane.xlu0 %657
        %v659 = vsub.f32 %v652, %v658
        %v660 = vmul.f32 %v659, 1.442695
        %v661 = vpow.pop %v660
        %662 = vadd.xlane.f32.xlu0 %v661
        %v663 = vpop.xlane.xlu0 %662
        %v664 = vrcp.pop %v663
        %v665 = vmul.f32 %v661, %v664
        %666 = vst [vmem:[%s362] sm:$0xff] %v665
        %s667 = sand.u32 %s240, 1
        %s668 = scalar_lea.sflag [#allocation3], %s667
        %s669 = sand.u32 %s240, 1
        %s670 = smul.addr %s669, 8
        %s671 = scalar_lea.vmem [#allocation2], %s670
        // Predicated region
        $region57: #{_forward_jit.1} parent=55 // pred_check
          %p672 = pneg %p250
        $region58: #{_forward_jit.1} parent=55 // pred_check_branch
          %674 = sbr.rel (%p672) target = $region60
        $region59: #{_forward_jit.1} parent=55 // pred_region
          %s676 = ssub.s32 128, 128
          %677 = vsyncadd %s668, %s676
          %s678 = smul.addr %s23, 128
          %s679 = scalar_lea.hbm %s9, %s678
          %s681 = sshll.u32 %s671, 4
          %s682 = int_to_ptr.vmem [resolvable:$true] %s681
          %684 = dma.vmem_to_hbm [thread:$0]  %s682, 128, %s679, %s668
        $region60: #{_forward_jit.1} parent=55 // pred_fallthru
          _
      $region56: #{_forward_jit.1} parent=5 // pred_fallthru
        _
      %p685 = scmp.le.s32.totalorder 2, %s18
      // Predicated region
      $region61: #{_forward_jit.1} parent=5 // pred_check
        %p686 = pneg %p685
      $region62: #{_forward_jit.1} parent=5 // pred_check_branch
        %688 = sbr.rel (%p686) target = $region64
      $region63: #{_forward_jit.1} parent=5 // pred_region
        %s689 = ssub.s32 %s18, 2
        // Predicated region
        $region65: #{_forward_jit.1} parent=63 // pred_check
          %p690 = pneg %p256
        $region66: #{_forward_jit.1} parent=63 // pred_check_branch
          %692 = sbr.rel (%p690) target = $region68
        $region67: #{_forward_jit.1} parent=63 // pred_region
          %s693 = sand.u32 %s241, 1
          %s694 = scalar_lea.sflag [#allocation3], %s693
          %s695 = sand.u32 %s241, 1
          %s696 = smul.addr %s695, 8
          %s697 = scalar_lea.vmem [#allocation2], %s696
          %698 = dma.done %s694, 128
        $region68: #{_forward_jit.1} parent=63 // pred_fallthru
          _
      $region64: #{_forward_jit.1} parent=5 // pred_fallthru
        _
    $region6: #{_forward_jit.1} parent=1 // loop_footer
      %s22 = sadd.s32 1, %s18
    $region7: #{_forward_jit.1} parent=1 // loop_footer_branch
      %17 = sbr.rel target = $region3
    $region8: #{_forward_jit.1} parent=1 // loop_exit
      _
    %699 = vsyncpa [#allocation3], 1
    %s700 = scalar_lea.sflag [#allocation3], 1
    %701 = vsyncpa %s700, 1

// kernel: _forward_jit.1
$region0: #{_forward_jit.1}
  #allocation0 [shape = 'u32[]', space=smem, size = 0x4, offset = 0x4, fixed_abs, tag = 'smem constant byte address 0x4 - core index']
  #allocation1 [shape = 'u32[144,128]{1,0:T(1,128)}', space=vmem, size = 0x12000, scoped, tag = 'internal scratch']
  %s0 = inlined_call_operand.vmem [shape: bf16[16,64], index: 0, kind: input, shape index: {}]
  %s1 = inlined_call_operand.vmem [shape: bf16[16,32], index: 1, kind: input, shape index: {}]
  %s2 = inlined_call_operand.vmem [shape: bf16[16,32], index: 2, kind: input, shape index: {}]
  %s3 = inlined_call_operand.vmem [shape: bf16[16,32], index: 3, kind: input, shape index: {}]
  %s4 = inlined_call_operand.vmem [shape: bf16[64,32], index: 4, kind: input, shape index: {}]
  %s5 = inlined_call_operand.vmem [shape: bf16[32,32], index: 5, kind: input, shape index: {}]
  %s6 = inlined_call_operand.vmem [shape: bf16[32,32], index: 6, kind: input, shape index: {}]
  %s7 = inlined_call_operand.vmem [shape: bf16[32,128], index: 7, kind: input, shape index: {}]
  %s8 = inlined_call_operand.vmem [shape: f32[1,128], index: 8, kind: input, shape index: {}]
  %s9 = inlined_call_operand.hbm [shape: f32[16,128], index: 9, kind: output, shape index: {}]
  %s10 = sld [smem:[#allocation0]]
  $region69: #{_forward_jit.1} parent=0
    _
  %s12 = ssub.s32 1, %s10
  %s13 = scalar_select 0, %s12, %s10
  $region1: #{_forward_jit.1} parent=0
    #allocation2 [shape = 'u8[8192]{0}', space=vmem, size = 0x2000, scoped, tag = 'output window, operand 0']
    #allocation3 [shape = 's32[2]{0}', space=sflag, size = 0x8, scoped, tag = 'scoped memory for _forward_jit.1']
    %14 = vsyncpa [#allocation3], 0
    %s15 = scalar_lea.sflag [#allocation3], 1
    %16 = vsyncpa %s15, 0
    loop: start=0, step=1, limit=4
    $region2: #{_forward_jit.1} parent=1 // loop_pre_header
      _
    $region3: #{_forward_jit.1} parent=1 // loop_header
      %s18 = sphi 0, %s22
      %p19 = scmp.ge.s32.totalorder %s18, 4
      %s28 = sphi 0, %s30
      %s31 = sphi 0, %s28
      %s32 = sphi 0, %s31
      %s48 = sphi 0, %s32
      %s54 = sphi 0, %s56
      %s57 = sphi 0, %s54
      %s58 = sphi 0, %s57
      %s74 = sphi 0, %s58
      %s80 = sphi 0, %s82
      %s83 = sphi 0, %s80
      %s84 = sphi 0, %s83
      %s100 = sphi 0, %s84
      %s106 = sphi 0, %s108
      %s109 = sphi 0, %s106
      %s110 = sphi 0, %s109
      %s126 = sphi 0, %s110
      %s130 = sphi 0, %s130
      %s132 = sphi 0, %s130
      %s133 = sphi 0, %s132
      %s147 = sphi 0, %s133
      %s151 = sphi 0, %s151
      %s153 = sphi 0, %s151
      %s154 = sphi 0, %s153
      %s168 = sphi 0, %s154
      %s172 = sphi 0, %s172
      %s174 = sphi 0, %s172
      %s175 = sphi 0, %s174
      %s189 = sphi 0, %s175
      %s193 = sphi 0, %s193
      %s195 = sphi 0, %s193
      %s196 = sphi 0, %s195
      %s210 = sphi 0, %s196
      %s214 = sphi 0, %s214
      %s216 = sphi 0, %s214
      %s217 = sphi 0, %s216
      %s231 = sphi 0, %s217
      %s237 = sphi 0, %s239
      %s240 = sphi 0, %s237
      %s241 = sphi 0, %s240
      %s257 = sphi 0, %s241
    $region4: #{_forward_jit.1} parent=1 // loop_header_branch
      %21 = sbr.rel (%p19) target = $region8
    $region5: #{_forward_jit.1} parent=1 // loop_body
      %s23 = ssub.s32 %s18, 1
      %s24 = ssub.s32 %s18, 2
      %s25 = sadd.s32 %s18, 1
      %s26 = ssub.s32 %s18, %s25
      %p27 = scmp.eq.s32.totalorder %s26, 0
      %s29 = sadd.s32 %s28, 1
      %s30 = scalar_select %p27, %s28, %s29
      %p33 = pneg %p27
      %p34 = scmp.eq.s32.totalorder %s18, 1
      %p35 = por %p33, %p34
      %p36 = scmp.ne.s32.totalorder %s28, %s31
      %p37 = scmp.eq.s32.totalorder %s18, 0
      %p38 = por %p36, %p37
      %p39 = scmp.ne.s32.totalorder %s28, %s31
      %p40 = scmp.eq.s32.totalorder %s23, 1
      %p41 = por %p39, %p40
      %p42 = scmp.ne.s32.totalorder %s31, %s32
      %p43 = scmp.eq.s32.totalorder %s23, 0
      %p44 = por %p42, %p43
      %p45 = scmp.ne.s32.totalorder %s31, %s32
      %p46 = scmp.eq.s32.totalorder %s24, 1
      %p47 = por %p45, %p46
      %p49 = scmp.ne.s32.totalorder %s32, %s48
      %p50 = scmp.eq.s32.totalorder %s24, 0
      %p51 = por %p49, %p50
      %s52 = ssub.s32 %s18, %s25
      %p53 = scmp.eq.s32.totalorder %s52, 0
      %s55 = sadd.s32 %s54, 1
      %s56 = scalar_select %p53, %s54, %s55
      %p59 = pneg %p53
      %p60 = scmp.eq.s32.totalorder %s18, 1
      %p61 = por %p59, %p60
      %p62 = scmp.ne.s32.totalorder %s54, %s57
      %p63 = scmp.eq.s32.totalorder %s18, 0
      %p64 = por %p62, %p63
      %p65 = scmp.ne.s32.totalorder %s54, %s57
      %p66 = scmp.eq.s32.totalorder %s23, 1
      %p67 = por %p65, %p66
      %p68 = scmp.ne.s32.totalorder %s57, %s58
      %p69 = scmp.eq.s32.totalorder %s23, 0
      %p70 = por %p68, %p69
      %p71 = scmp.ne.s32.totalorder %s57, %s58
      %p72 = scmp.eq.s32.totalorder %s24, 1
      %p73 = por %p71, %p72
      %p75 = scmp.ne.s32.totalorder %s58, %s74
      %p76 = scmp.eq.s32.totalorder %s24, 0
      %p77 = por %p75, %p76
      %s78 = ssub.s32 %s18, %s25
      %p79 = scmp.eq.s32.totalorder %s78, 0
      %s81 = sadd.s32 %s80, 1
      %s82 = scalar_select %p79, %s80, %s81
      %p85 = pneg %p79
      %p86 = scmp.eq.s32.totalorder %s18, 1
      %p87 = por %p85, %p86
      %p88 = scmp.ne.s32.totalorder %s80, %s83
      %p89 = scmp.eq.s32.totalorder %s18, 0
      %p90 = por %p88, %p89
      %p91 = scmp.ne.s32.totalorder %s80, %s83
      %p92 = scmp.eq.s32.totalorder %s23, 1
      %p93 = por %p91, %p92
      %p94 = scmp.ne.s32.totalorder %s83, %s84
      %p95 = scmp.eq.s32.totalorder %s23, 0
      %p96 = por %p94, %p95
      %p97 = scmp.ne.s32.totalorder %s83, %s84
      %p98 = scmp.eq.s32.totalorder %s24, 1
      %p99 = por %p97, %p98
      %p101 = scmp.ne.s32.totalorder %s84, %s100
      %p102 = scmp.eq.s32.totalorder %s24, 0
      %p103 = por %p101, %p102
      %s104 = ssub.s32 %s18, %s25
      %p105 = scmp.eq.s32.totalorder %s104, 0
      %s107 = sadd.s32 %s106, 1
      %s108 = scalar_select %p105, %s106, %s107
      %p111 = pneg %p105
      %p112 = scmp.eq.s32.totalorder %s18, 1
      %p113 = por %p111, %p112
      %p114 = scmp.ne.s32.totalorder %s106, %s109
      %p115 = scmp.eq.s32.totalorder %s18, 0
      %p116 = por %p114, %p115
      %p117 = scmp.ne.s32.totalorder %s106, %s109
      %p118 = scmp.eq.s32.totalorder %s23, 1
      %p119 = por %p117, %p118
      %p120 = scmp.ne.s32.totalorder %s109, %s110
      %p121 = scmp.eq.s32.totalorder %s23, 0
      %p122 = por %p120, %p121
      %p123 = scmp.ne.s32.totalorder %s109, %s110
      %p124 = scmp.eq.s32.totalorder %s24, 1
      %p125 = por %p123, %p124
      %p127 = scmp.ne.s32.totalorder %s110, %s126
      %p128 = scmp.eq.s32.totalorder %s24, 0
      %p129 = por %p127, %p128
      %s131 = sadd.s32 %s130, 1
      %p134 = scmp.eq.s32.totalorder %s18, 1
      %p135 = scmp.ne.s32.totalorder %s130, %s132
      %p136 = scmp.eq.s32.totalorder %s18, 0
      %p137 = por %p135, %p136
      %p138 = scmp.ne.s32.totalorder %s130, %s132
      %p139 = scmp.eq.s32.totalorder %s23, 1
      %p140 = por %p138, %p139
      %p141 = scmp.ne.s32.totalorder %s132, %s133
      %p142 = scmp.eq.s32.totalorder %s23, 0
      %p143 = por %p141, %p142
      %p144 = scmp.ne.s32.totalorder %s132, %s133
      %p145 = scmp.eq.s32.totalorder %s24, 1
      %p146 = por %p144, %p145
      %p148 = scmp.ne.s32.totalorder %s133, %s147
      %p149 = scmp.eq.s32.totalorder %s24, 0
      %p150 = por %p148, %p149
      %s152 = sadd.s32 %s151, 1
      %p155 = scmp.eq.s32.totalorder %s18, 1
      %p156 = scmp.ne.s32.totalorder %s151, %s153
      %p157 = scmp.eq.s32.totalorder %s18, 0
      %p158 = por %p156, %p157
      %p159 = scmp.ne.s32.totalorder %s151, %s153
      %p160 = scmp.eq.s32.totalorder %s23, 1
      %p161 = por %p159, %p160
      %p162 = scmp.ne.s32.totalorder %s153, %s154
      %p163 = scmp.eq.s32.totalorder %s23, 0
      %p164 = por %p162, %p163
      %p165 = scmp.ne.s32.totalorder %s153, %s154
      %p166 = scmp.eq.s32.totalorder %s24, 1
      %p167 = por %p165, %p166
      %p169 = scmp.ne.s32.totalorder %s154, %s168
      %p170 = scmp.eq.s32.totalorder %s24, 0
      %p171 = por %p169, %p170
      %s173 = sadd.s32 %s172, 1
      %p176 = scmp.eq.s32.totalorder %s18, 1
      %p177 = scmp.ne.s32.totalorder %s172, %s174
      %p178 = scmp.eq.s32.totalorder %s18, 0
      %p179 = por %p177, %p178
      %p180 = scmp.ne.s32.totalorder %s172, %s174
      %p181 = scmp.eq.s32.totalorder %s23, 1
      %p182 = por %p180, %p181
      %p183 = scmp.ne.s32.totalorder %s174, %s175
      %p184 = scmp.eq.s32.totalorder %s23, 0
      %p185 = por %p183, %p184
      %p186 = scmp.ne.s32.totalorder %s174, %s175
      %p187 = scmp.eq.s32.totalorder %s24, 1
      %p188 = por %p186, %p187
      %p190 = scmp.ne.s32.totalorder %s175, %s189
      %p191 = scmp.eq.s32.totalorder %s24, 0
      %p192 = por %p190, %p191
      %s194 = sadd.s32 %s193, 1
      %p197 = scmp.eq.s32.totalorder %s18, 1
      %p198 = scmp.ne.s32.totalorder %s193, %s195
      %p199 = scmp.eq.s32.totalorder %s18, 0
      %p200 = por %p198, %p199
      %p201 = scmp.ne.s32.totalorder %s193, %s195
      %p202 = scmp.eq.s32.totalorder %s23, 1
      %p203 = por %p201, %p202
      %p204 = scmp.ne.s32.totalorder %s195, %s196
      %p205 = scmp.eq.s32.totalorder %s23, 0
      %p206 = por %p204, %p205
      %p207 = scmp.ne.s32.totalorder %s195, %s196
      %p208 = scmp.eq.s32.totalorder %s24, 1
      %p209 = por %p207, %p208
      %p211 = scmp.ne.s32.totalorder %s196, %s210
      %p212 = scmp.eq.s32.totalorder %s24, 0
      %p213 = por %p211, %p212
      %s215 = sadd.s32 %s214, 1
      %p218 = scmp.eq.s32.totalorder %s18, 1
      %p219 = scmp.ne.s32.totalorder %s214, %s216
      %p220 = scmp.eq.s32.totalorder %s18, 0
      %p221 = por %p219, %p220
      %p222 = scmp.ne.s32.totalorder %s214, %s216
      %p223 = scmp.eq.s32.totalorder %s23, 1
      %p224 = por %p222, %p223
      %p225 = scmp.ne.s32.totalorder %s216, %s217
      %p226 = scmp.eq.s32.totalorder %s23, 0
      %p227 = por %p225, %p226
      %p228 = scmp.ne.s32.totalorder %s216, %s217
      %p229 = scmp.eq.s32.totalorder %s24, 1
      %p230 = por %p228, %p229
      %p232 = scmp.ne.s32.totalorder %s217, %s231
      %p233 = scmp.eq.s32.totalorder %s24, 0
      %p234 = por %p232, %p233
      %s235 = ssub.s32 %s18, %s25
      %p236 = scmp.eq.s32.totalorder %s235, 0
      %s238 = sadd.s32 %s237, 1
      %s239 = scalar_select %p236, %s237, %s238
      %p242 = pneg %p236
      %p243 = scmp.eq.s32.totalorder %s18, 1
      %p244 = por %p242, %p243
      %p245 = scmp.ne.s32.totalorder %s237, %s240
      %p246 = scmp.eq.s32.totalorder %s18, 0
      %p247 = por %p245, %p246
      %p248 = scmp.ne.s32.totalorder %s237, %s240
      %p249 = scmp.eq.s32.totalorder %s23, 1
      %p250 = por %p248, %p249
      %p251 = scmp.ne.s32.totalorder %s240, %s241
      %p252 = scmp.eq.s32.totalorder %s23, 0
      %p253 = por %p251, %p252
      %p254 = scmp.ne.s32.totalorder %s240, %s241
      %p255 = scmp.eq.s32.totalorder %s24, 1
      %p256 = por %p254, %p255
      %p258 = scmp.ne.s32.totalorder %s241, %s257
      %p259 = scmp.eq.s32.totalorder %s24, 0
      %p260 = por %p258, %p259
      %p261 = scmp.le.s32.totalorder 1, %s18
      %p262 = scmp.lt.s32.totalorder %s18, 3
      %p263 = pnand %p261, %p262
      %p264 = pneg %p263
      // Predicated region
      $region9: #{_forward_jit.1} parent=5 // pred_check
        _
      $region10: #{_forward_jit.1} parent=5 // pred_check_branch
        %266 = sbr.rel (%p263) target = $region12
      $region11: #{_forward_jit.1} parent=5 // pred_region
        %s267 = ssub.s32 %s18, 1
        // Predicated region
        $region13: #{_forward_jit.1} parent=11 // pred_check
          %p268 = pneg %p143
        $region14: #{_forward_jit.1} parent=11 // pred_check_branch
          %270 = sbr.rel (%p268) target = $region16
        $region15: #{_forward_jit.1} parent=11 // pred_region
          _
        $region16: #{_forward_jit.1} parent=11 // pred_fallthru
          _
        // Predicated region
        $region17: #{_forward_jit.1} parent=11 // pred_check
          %p271 = pneg %p164
        $region18: #{_forward_jit.1} parent=11 // pred_check_branch
          %273 = sbr.rel (%p271) target = $region20
        $region19: #{_forward_jit.1} parent=11 // pred_region
          _
        $region20: #{_forward_jit.1} parent=11 // pred_fallthru
          _
        // Predicated region
        $region21: #{_forward_jit.1} parent=11 // pred_check
          %p274 = pneg %p185
        $region22: #{_forward_jit.1} parent=11 // pred_check_branch
          %276 = sbr.rel (%p274) target = $region24
        $region23: #{_forward_jit.1} parent=11 // pred_region
          _
        $region24: #{_forward_jit.1} parent=11 // pred_fallthru
          _
        // Predicated region
        $region25: #{_forward_jit.1} parent=11 // pred_check
          %p277 = pneg %p206
        $region26: #{_forward_jit.1} parent=11 // pred_check_branch
          %279 = sbr.rel (%p277) target = $region28
        $region27: #{_forward_jit.1} parent=11 // pred_region
          _
        $region28: #{_forward_jit.1} parent=11 // pred_fallthru
          _
        // Predicated region
        $region29: #{_forward_jit.1} parent=11 // pred_check
          %p280 = pneg %p227
        $region30: #{_forward_jit.1} parent=11 // pred_check_branch
          %282 = sbr.rel (%p280) target = $region32
        $region31: #{_forward_jit.1} parent=11 // pred_region
          _
        $region32: #{_forward_jit.1} parent=11 // pred_fallthru
          _
      $region12: #{_forward_jit.1} parent=5 // pred_fallthru
        _
      %p283 = scmp.lt.s32.totalorder %s18, 2
      // Predicated region
      $region33: #{_forward_jit.1} parent=5 // pred_check
        %p284 = pneg %p283
      $region34: #{_forward_jit.1} parent=5 // pred_check_branch
        %286 = sbr.rel (%p284) target = $region36
      $region35: #{_forward_jit.1} parent=5 // pred_region
        // Predicated region
        $region37: #{_forward_jit.1} parent=35 // pred_check
          %p287 = pneg %p38
        $region38: #{_forward_jit.1} parent=35 // pred_check_branch
          %289 = sbr.rel (%p287) target = $region40
        $region39: #{_forward_jit.1} parent=35 // pred_region
          %p290 = scmp.lt.s32.totalorder %s18, 1
          %s291 = scalar_select %p290, %s18, 1
          %s292 = smul.addr %s291, 4
          %s293 = scalar_lea.vmem %s0, %s292
        $region40: #{_forward_jit.1} parent=35 // pred_fallthru
          _
        // Predicated region
        $region41: #{_forward_jit.1} parent=35 // pred_check
          %p294 = pneg %p64
        $region42: #{_forward_jit.1} parent=35 // pred_check_branch
          %296 = sbr.rel (%p294) target = $region44
        $region43: #{_forward_jit.1} parent=35 // pred_region
          %p297 = scmp.lt.s32.totalorder %s18, 1
          %s298 = scalar_select %p297, %s18, 1
          %s299 = smul.addr %s298, 4
          %s300 = scalar_lea.vmem %s1, %s299
        $region44: #{_forward_jit.1} parent=35 // pred_fallthru
          _
        // Predicated region
        $region45: #{_forward_jit.1} parent=35 // pred_check
          %p301 = pneg %p90
        $region46: #{_forward_jit.1} parent=35 // pred_check_branch
          %303 = sbr.rel (%p301) target = $region48
        $region47: #{_forward_jit.1} parent=35 // pred_region
          %p304 = scmp.lt.s32.totalorder %s18, 1
          %s305 = scalar_select %p304, %s18, 1
          %s306 = smul.addr %s305, 4
          %s307 = scalar_lea.vmem %s2, %s306
        $region48: #{_forward_jit.1} parent=35 // pred_fallthru
          _
        // Predicated region
        $region49: #{_forward_jit.1} parent=35 // pred_check
          %p308 = pneg %p116
        $region50: #{_forward_jit.1} parent=35 // pred_check_branch
          %310 = sbr.rel (%p308) target = $region52
        $region51: #{_forward_jit.1} parent=35 // pred_region
          %p311 = scmp.lt.s32.totalorder %s18, 1
          %s312 = scalar_select %p311, %s18, 1
          %s313 = smul.addr %s312, 4
          %s314 = scalar_lea.vmem %s3, %s313
        $region52: #{_forward_jit.1} parent=35 // pred_fallthru
          _
      $region36: #{_forward_jit.1} parent=5 // pred_fallthru
        _
      %p315 = scmp.le.s32.totalorder 1, %s18
      %p316 = scmp.lt.s32.totalorder %s18, 3
      %p317 = pnand %p315, %p316
      %p318 = pneg %p317
      // Predicated region
      $region53: #{_forward_jit.1} parent=5 // pred_check
        _
      $region54: #{_forward_jit.1} parent=5 // pred_check_branch
        %320 = sbr.rel (%p317) target = $region56
      $region55: #{_forward_jit.1} parent=5 // pred_region
        %s321 = ssub.s32 %s18, 1
        %p322 = scmp.lt.s32.totalorder %s23, 1
        %s323 = scalar_select %p322, %s23, 1
        %s324 = smul.addr %s323, 4
        %s325 = scalar_lea.vmem %s0, %s324
        %p326 = pneg %p44
        %p327 = pneg %p41
        %p328 = scmp.lt.s32.totalorder %s23, 1
        %s329 = scalar_select %p328, %s23, 1
        %s330 = smul.addr %s329, 4
        %s331 = scalar_lea.vmem %s1, %s330
        %p332 = pneg %p70
        %p333 = pneg %p67
        %p334 = scmp.lt.s32.totalorder %s23, 1
        %s335 = scalar_select %p334, %s23, 1
        %s336 = smul.addr %s335, 4
        %s337 = scalar_lea.vmem %s2, %s336
        %p338 = pneg %p96
        %p339 = pneg %p93
        %p340 = scmp.lt.s32.totalorder %s23, 1
        %s341 = scalar_select %p340, %s23, 1
        %s342 = smul.addr %s341, 4
        %s343 = scalar_lea.vmem %s3, %s342
        %p344 = pneg %p122
        %p345 = pneg %p119
        %p346 = pneg %p143
        %p347 = pneg %p140
        %p348 = pneg %p164
        %p349 = pneg %p161
        %p350 = pneg %p185
        %p351 = pneg %p182
        %p352 = pneg %p206
        %p353 = pneg %p203
        %p354 = pneg %p227
        %p355 = pneg %p224
        %p356 = pneg %p253
        %p357 = pneg %p250
        %s358 = sand.u32 %s240, 1
        %s359 = scalar_lea.sflag [#allocation3], %s358
        %s360 = sand.u32 %s240, 1
        %s361 = smul.addr %s360, 8
        %s362 = scalar_lea.vmem [#allocation2], %s361
        %p363 = scmp.lt.s32.totalorder %s23, 1
        %s364 = scalar_select %p363, %s23, 1
        %s365 = smul.addr %s364, 4
        %s366 = scalar_lea.vmem %s0, %s365
        %p367 = scmp.lt.s32.totalorder %s23, 1
        %s368 = scalar_select %p367, %s23, 1
        %s369 = smul.addr %s368, 4
        %s370 = scalar_lea.vmem %s1, %s369
        %p371 = scmp.lt.s32.totalorder %s23, 1
        %s372 = scalar_select %p371, %s23, 1
        %s373 = smul.addr %s372, 4
        %s374 = scalar_lea.vmem %s2, %s373
        %p375 = scmp.lt.s32.totalorder %s23, 1
        %s376 = scalar_select %p375, %s23, 1
        %s377 = smul.addr %s376, 4
        %s378 = scalar_lea.vmem %s3, %s377
        %v380 = vld [vmem:[%s366] sm:$0xf]
        %v381 = vld [vmem:[%s4] sm:$0xf]
        %v382 = vld [vmem:[%s4 + $0x4] sm:$0xf]
        %v383 = vld [vmem:[%s4 + $0x8] sm:$0xf]
        %v384 = vld [vmem:[%s4 + $0xc] sm:$0xf]
        %v385 = vld [vmem:[%s4 + $0x10] sm:$0xf]
        %v386 = vld [vmem:[%s4 + $0x14] sm:$0xf]
        %v387 = vld [vmem:[%s4 + $0x18] sm:$0xf]
        %v388 = vld [vmem:[%s4 + $0x1c] sm:$0xf]
        %v397 = vunpack.c.l.b16 %v381
        %v398 = vunpack.c.l.b16 %v382
        %v399 = vunpack.c.l.b16 %v383
        %v400 = vunpack.c.l.b16 %v384
        %v401 = vunpack.c.l.b16 %v385
        %v402 = vunpack.c.l.b16 %v386
        %v403 = vunpack.c.l.b16 %v387
        %v404 = vunpack.c.l.b16 %v388
        %v405 = vpack.c.b16 %v398, %v397
        %v406 = vpack.c.b16 %v400, %v399
        %v407 = vpack.c.b16 %v402, %v401
        %v408 = vpack.c.b16 %v404, %v403
        %vm413 = vcmask 523264
        %v415 = vsel %vm413, %v380, 0
        %417 = vmatprep.subr.bf16.mxu0 0
        %418 = vmatpush1.bf16.msra.mxu0 %v405
        %419 = vmatprep.subr.bf16.mxu0 0
        %420 = vmatpush1.bf16.msra.mxu0 %v406
        %421 = vmatprep.subr.bf16.mxu0 0
        %422 = vmatpush1.bf16.msra.mxu0 %v407
        %423 = vmatprep.subr.bf16.mxu0 0
        %424 = vmatpush1.bf16.msra.mxu0 %v408
        %425 = vmatprep.subr.bf16.mxu0 0
        %426 = vmatpush1.bf16.msra.mxu0 0
        %427 = vmatprep.subr.bf16.mxu0 0
        %428 = vmatpush1.bf16.msra.mxu0 0
        %429 = vmatprep.subr.bf16.mxu0 0
        %430 = vmatpush1.bf16.msra.mxu0 0
        %431 = vmatprep.subr.bf16.mxu0 0
        %432 = vmatpush1.bf16.msra.mxu0 0
        %433 = vmatprep.subr.bf16.mxu0 0
        %434 = vmatpush1.bf16.msra.mxu0 0
        %435 = vmatprep.subr.bf16.mxu0 0
        %436 = vmatpush1.bf16.msra.mxu0 0
        %437 = vmatprep.subr.bf16.mxu0 0
        %438 = vmatpush1.bf16.msra.mxu0 0
        %439 = vmatprep.subr.bf16.mxu0 0
        %440 = vmatpush1.bf16.msra.mxu0 0
        %441 = vmatprep.subr.bf16.mxu0 0
        %442 = vmatpush1.bf16.msra.mxu0 0
        %443 = vmatprep.subr.bf16.mxu0 0
        %444 = vmatpush1.bf16.msra.mxu0 0
        %445 = vmatprep.subr.bf16.mxu0 0
        %446 = vmatpush1.bf16.msra.mxu0 0
        %447 = vmatprep.subr.bf16.mxu0 0
        %448 = vmatpush1.bf16.msra.mxu0 0
        %449 = vmatprep.mubr.bf16.mxu0 0
        %450 = vmatmul.mubr.bf16.gmra.mrb[0].mxu0 %v415
        %v451 = vpop.f32.mrb[0].mxu0
        %v452 = vadd.f32 0.0, %v451
        %v453 = vpop.f32.mrb[0].mxu0
        %v454 = vpop.f32.mrb[0].mxu0
        %v455 = vpop.f32.mrb[0].mxu0
        %456 = vdwg.mxu0
        %v457 = vmax.f32 %v452, 0.0
        %v458 = vld [vmem:[%s370] sm:$0xf]
        %v459 = vunpack.c.l.bf16 %v458
        %v460 = vmul.f32 %v457, %v459
        %v461 = vpack.c.bf16 %v460, %v460
        %v462 = vld [vmem:[%s5] sm:$0xf]
        %v463 = vld [vmem:[%s5 + $0x4] sm:$0xf]
        %v464 = vld [vmem:[%s5 + $0x8] sm:$0xf]
        %v465 = vld [vmem:[%s5 + $0xc] sm:$0xf]
        %v470 = vunpack.c.l.b16 %v462
        %v471 = vunpack.c.l.b16 %v463
        %v472 = vunpack.c.l.b16 %v464
        %v473 = vunpack.c.l.b16 %v465
        %v474 = vpack.c.b16 %v471, %v470
        %v475 = vpack.c.b16 %v473, %v472
        %vm478 = vcmask 261120
        %v480 = vsel %vm478, %v461, 0
        %482 = vmatprep.subr.bf16.mxu0 0
        %483 = vmatpush1.bf16.msra.mxu0 %v474
        %484 = vmatprep.subr.bf16.mxu0 0
        %485 = vmatpush1.bf16.msra.mxu0 %v475
        %486 = vmatprep.subr.bf16.mxu0 0
        %487 = vmatpush1.bf16.msra.mxu0 0
        %488 = vmatprep.subr.bf16.mxu0 0
        %489 = vmatpush1.bf16.msra.mxu0 0
        %490 = vmatprep.subr.bf16.mxu0 0
        %491 = vmatpush1.bf16.msra.mxu0 0
        %492 = vmatprep.subr.bf16.mxu0 0
        %493 = vmatpush1.bf16.msra.mxu0 0
        %494 = vmatprep.subr.bf16.mxu0 0
        %495 = vmatpush1.bf16.msra.mxu0 0
        %496 = vmatprep.subr.bf16.mxu0 0
        %497 = vmatpush1.bf16.msra.mxu0 0
        %498 = vmatprep.subr.bf16.mxu0 0
        %499 = vmatpush1.bf16.msra.mxu0 0
        %500 = vmatprep.subr.bf16.mxu0 0
        %501 = vmatpush1.bf16.msra.mxu0 0
        %502 = vmatprep.subr.bf16.mxu0 0
        %503 = vmatpush1.bf16.msra.mxu0 0
        %504 = vmatprep.subr.bf16.mxu0 0
        %505 = vmatpush1.bf16.msra.mxu0 0
        %506 = vmatprep.subr.bf16.mxu0 0
        %507 = vmatpush1.bf16.msra.mxu0 0
        %508 = vmatprep.subr.bf16.mxu0 0
        %509 = vmatpush1.bf16.msra.mxu0 0
        %510 = vmatprep.subr.bf16.mxu0 0
        %511 = vmatpush1.bf16.msra.mxu0 0
        %512 = vmatprep.subr.bf16.mxu0 0
        %513 = vmatpush1.bf16.msra.mxu0 0
        %514 = vmatprep.mubr.bf16.mxu0 0
        %515 = vmatmul.mubr.bf16.gmra.mrb[0].mxu0 %v480
        %v516 = vpop.f32.mrb[0].mxu0
        %v517 = vadd.f32 0.0, %v516
        %v518 = vpop.f32.mrb[0].mxu0
        %v519 = vpop.f32.mrb[0].mxu0
        %v520 = vpop.f32.mrb[0].mxu0
        %521 = vdwg.mxu0
        %v522 = vmax.f32 %v517, 0.0
        %v523 = vld [vmem:[%s374] sm:$0xf]
        %v524 = vunpack.c.l.bf16 %v523
        %v525 = vmul.f32 %v522, %v524
        %v526 = vpack.c.bf16 %v525, %v525
        %v527 = vld [vmem:[%s6] sm:$0xf]
        %v528 = vld [vmem:[%s6 + $0x4] sm:$0xf]
        %v529 = vld [vmem:[%s6 + $0x8] sm:$0xf]
        %v530 = vld [vmem:[%s6 + $0xc] sm:$0xf]
        %v535 = vunpack.c.l.b16 %v527
        %v536 = vunpack.c.l.b16 %v528
        %v537 = vunpack.c.l.b16 %v529
        %v538 = vunpack.c.l.b16 %v530
        %v539 = vpack.c.b16 %v536, %v535
        %v540 = vpack.c.b16 %v538, %v537
        %v544 = vsel %vm478, %v526, 0
        %546 = vmatprep.subr.bf16.mxu0 0
        %547 = vmatpush1.bf16.msra.mxu0 %v539
        %548 = vmatprep.subr.bf16.mxu0 0
        %549 = vmatpush1.bf16.msra.mxu0 %v540
        %550 = vmatprep.subr.bf16.mxu0 0
        %551 = vmatpush1.bf16.msra.mxu0 0
        %552 = vmatprep.subr.bf16.mxu0 0
        %553 = vmatpush1.bf16.msra.mxu0 0
        %554 = vmatprep.subr.bf16.mxu0 0
        %555 = vmatpush1.bf16.msra.mxu0 0
        %556 = vmatprep.subr.bf16.mxu0 0
        %557 = vmatpush1.bf16.msra.mxu0 0
        %558 = vmatprep.subr.bf16.mxu0 0
        %559 = vmatpush1.bf16.msra.mxu0 0
        %560 = vmatprep.subr.bf16.mxu0 0
        %561 = vmatpush1.bf16.msra.mxu0 0
        %562 = vmatprep.subr.bf16.mxu0 0
        %563 = vmatpush1.bf16.msra.mxu0 0
        %564 = vmatprep.subr.bf16.mxu0 0
        %565 = vmatpush1.bf16.msra.mxu0 0
        %566 = vmatprep.subr.bf16.mxu0 0
        %567 = vmatpush1.bf16.msra.mxu0 0
        %568 = vmatprep.subr.bf16.mxu0 0
        %569 = vmatpush1.bf16.msra.mxu0 0
        %570 = vmatprep.subr.bf16.mxu0 0
        %571 = vmatpush1.bf16.msra.mxu0 0
        %572 = vmatprep.subr.bf16.mxu0 0
        %573 = vmatpush1.bf16.msra.mxu0 0
        %574 = vmatprep.subr.bf16.mxu0 0
        %575 = vmatpush1.bf16.msra.mxu0 0
        %576 = vmatprep.subr.bf16.mxu0 0
        %577 = vmatpush1.bf16.msra.mxu0 0
        %578 = vmatprep.mubr.bf16.mxu0 0
        %579 = vmatmul.mubr.bf16.gmra.mrb[0].mxu0 %v544
        %v580 = vpop.f32.mrb[0].mxu0
        %v581 = vadd.f32 0.0, %v580
        %v582 = vpop.f32.mrb[0].mxu0
        %v583 = vpop.f32.mrb[0].mxu0
        %v584 = vpop.f32.mrb[0].mxu0
        %585 = vdwg.mxu0
        %v586 = vmax.f32 %v581, 0.0
        %v587 = vld [vmem:[%s378] sm:$0xf]
        %v588 = vunpack.c.l.bf16 %v587
        %v589 = vmul.f32 %v586, %v588
        %v590 = vpack.c.bf16 %v589, %v589
        %v591 = vld [vmem:[%s7] sm:$0xf]
        %v592 = vld [vmem:[%s7 + $0x4] sm:$0xf]
        %v593 = vld [vmem:[%s7 + $0x8] sm:$0xf]
        %v594 = vld [vmem:[%s7 + $0xc] sm:$0xf]
        %v595 = vld [vmem:[%s8] sm:$0x1]
        %v597 = vlaneseq
        %v598 = vshrl.u32 %v597, 7
        %v599 = vsub.s32 0, %v598
        %v600 = vrot.slane %v595, %v599
        %v606 = vunpack.c.l.b16 %v591
        %v607 = vunpack.c.l.b16 %v592
        %v608 = vunpack.c.l.b16 %v593
        %v609 = vunpack.c.l.b16 %v594
        %v610 = vpack.c.b16 %v607, %v606
        %v611 = vpack.c.b16 %v609, %v608
        %v615 = vsel %vm478, %v590, 0
        %617 = vmatprep.subr.bf16.mxu0 0
        %618 = vmatpush1.bf16.msra.mxu0 %v610
        %619 = vmatprep.subr.bf16.mxu0 0
        %620 = vmatpush1.bf16.msra.mxu0 %v611
        %621 = vmatprep.subr.bf16.mxu0 0
        %622 = vmatpush1.bf16.msra.mxu0 0
        %623 = vmatprep.subr.bf16.mxu0 0
        %624 = vmatpush1.bf16.msra.mxu0 0
        %625 = vmatprep.subr.bf16.mxu0 0
        %626 = vmatpush1.bf16.msra.mxu0 0
        %627 = vmatprep.subr.bf16.mxu0 0
        %628 = vmatpush1.bf16.msra.mxu0 0
        %629 = vmatprep.subr.bf16.mxu0 0
        %630 = vmatpush1.bf16.msra.mxu0 0
        %631 = vmatprep.subr.bf16.mxu0 0
        %632 = vmatpush1.bf16.msra.mxu0 0
        %633 = vmatprep.subr.bf16.mxu0 0
        %634 = vmatpush1.bf16.msra.mxu0 0
        %635 = vmatprep.subr.bf16.mxu0 0
        %636 = vmatpush1.bf16.msra.mxu0 0
        %637 = vmatprep.subr.bf16.mxu0 0
        %638 = vmatpush1.bf16.msra.mxu0 0
        %639 = vmatprep.subr.bf16.mxu0 0
        %640 = vmatpush1.bf16.msra.mxu0 0
        %641 = vmatprep.subr.bf16.mxu0 0
        %642 = vmatpush1.bf16.msra.mxu0 0
        %643 = vmatprep.subr.bf16.mxu0 0
        %644 = vmatpush1.bf16.msra.mxu0 0
        %645 = vmatprep.subr.bf16.mxu0 0
        %646 = vmatpush1.bf16.msra.mxu0 0
        %647 = vmatprep.subr.bf16.mxu0 0
        %648 = vmatpush1.bf16.msra.mxu0 0
        %649 = vmatprep.mubr.bf16.mxu0 0
        %650 = vmatmul.mubr.bf16.gmra.mrb[0].mxu0 %v615
        %v651 = vpop.f32.mrb[0].mxu0
        %v652 = vadd.f32 %v600, %v651
        %v653 = vpop.f32.mrb[0].mxu0
        %v654 = vpop.f32.mrb[0].mxu0
        %v655 = vpop.f32.mrb[0].mxu0
        %656 = vdwg.mxu0
        %657 = vmax.xlane.f32.xlu0 %v652
        %v658 = vpop.xlane.xlu0 %657
        %v659 = vsub.f32 %v652, %v658
        %v660 = vmul.f32 %v659, 1.442695
        %v661 = vpow.pop %v660
        %662 = vadd.xlane.f32.xlu0 %v661
        %v663 = vpop.xlane.xlu0 %662
        %v664 = vrcp.pop %v663
        %v665 = vmul.f32 %v661, %v664
        %666 = vst [vmem:[%s362] sm:$0xff] %v665
        %s667 = sand.u32 %s240, 1
        %s668 = scalar_lea.sflag [#allocation3], %s667
        %s669 = sand.u32 %s240, 1
        %s670 = smul.addr %s669, 8
        %s671 = scalar_lea.vmem [#allocation2], %s670
        // Predicated region
        $region57: #{_forward_jit.1} parent=55 // pred_check
          %p672 = pneg %p250
        $region58: #{_forward_jit.1} parent=55 // pred_check_branch
          %674 = sbr.rel (%p672) target = $region60
        $region59: #{_forward_jit.1} parent=55 // pred_region
          %s676 = ssub.s32 128, 128
          %677 = vsyncadd %s668, %s676
          %s678 = smul.addr %s23, 128
          %s679 = scalar_lea.hbm %s9, %s678
          %s681 = sshll.u32 %s671, 4
          %s682 = int_to_ptr.vmem [resolvable:$true] %s681
          %684 = dma.vmem_to_hbm [thread:$0]  %s682, 128, %s679, %s668
        $region60: #{_forward_jit.1} parent=55 // pred_fallthru
          _
      $region56: #{_forward_jit.1} parent=5 // pred_fallthru
        _
      %p685 = scmp.le.s32.totalorder 2, %s18
      // Predicated region
      $region61: #{_forward_jit.1} parent=5 // pred_check
        %p686 = pneg %p685
      $region62: #{_forward_jit.1} parent=5 // pred_check_branch
        %688 = sbr.rel (%p686) target = $region64
      $region63: #{_forward_jit.1} parent=5 // pred_region
        %s689 = ssub.s32 %s18, 2
        // Predicated region
        $region65: #{_forward_jit.1} parent=63 // pred_check
          %p690 = pneg %p256
        $region66: #{_forward_jit.1} parent=63 // pred_check_branch
          %692 = sbr.rel (%p690) target = $region68
        $region67: #{_forward_jit.1} parent=63 // pred_region
          %s693 = sand.u32 %s241, 1
          %s694 = scalar_lea.sflag [#allocation3], %s693
          %s695 = sand.u32 %s241, 1
          %s696 = smul.addr %s695, 8
          %s697 = scalar_lea.vmem [#allocation2], %s696
          %698 = dma.done %s694, 128
        $region68: #{_forward_jit.1} parent=63 // pred_fallthru
          _
      $region64: #{_forward_jit.1} parent=5 // pred_fallthru
        _
    $region6: #{_forward_jit.1} parent=1 // loop_footer
      %s22 = sadd.s32 1, %s18
    $region7: #{_forward_jit.1} parent=1 // loop_footer_branch
      %17 = sbr.rel target = $region3
    $region8: #{_forward_jit.1} parent=1 // loop_exit
      _
    %699 = vsyncpa [#allocation3], 1
    %s700 = scalar_lea.sflag [#allocation3], 1
    %701 = vsyncpa %s700, 1

</llo_original>
